<compile_context>
chip_gen: v5e
topology: v5e:2x2
jax: 0.10.0
libtpu: 0.0.40
codegen_flags: <defaults>
</compile_context>

<pallas_src>
import jax
import jax.numpy as jnp
from jax.experimental import pallas as pl
from jax.experimental.pallas import tpu as pltpu

INPUT_DIM = 15
H_DIM = 8
Z_DIM = 2
CLASSES = 10

PAD = 128                       # lane width
NL = 11                         # packed layer slots (fc_mu & fc_log_var share slot 4)

# lane layout of the single packed 128-lane output block
LV_OFF = 0                      # log_var  lanes [0, 2)
MU_OFF = Z_DIM                  # mu       lanes [2, 4)
REC_OFF = 2 * Z_DIM             # rec      lanes [4, 19)
CLS_OFF = REC_OFF + INPUT_DIM   # cls      lanes [19, 29)


# ----------------------------------------------------------------------------
# Pallas kernel: full VAE_class.forward() hot path on-chip.
#   inputs : x_ref   (TB, INPUT_DIM)  unpadded
#            eps_ref (TB, Z_DIM)      unpadded reparameterization noise
#            w_ref   (NL, PAD, PAD)   packed, pre-transposed (in_pad, out_pad)
#            b_ref   (NL, PAD)        packed biases
#   output : out_ref (TB, PAD)        lanes: lv[0,2) | mu[2,4) | rec[4,19) | cls[19,29)
#   scratch: pad_ref (TB, PAD)        lane-widening staging buffer
# ----------------------------------------------------------------------------
def vae_forward_kernel(x_ref, eps_ref, w_ref, b_ref, out_ref, pad_ref):
    tb = out_ref.shape[0]

    def linear(h, i):
        # weights pre-transposed to (in_pad, out_pad); bias row broadcast over batch
        return jnp.dot(h, w_ref[i], preferred_element_type=jnp.float32) + b_ref[i:i + 1]

    def relu(v):
        return jnp.maximum(v, 0.0)

    lane = jax.lax.broadcasted_iota(jnp.int32, (tb, PAD), 1)

    # widen x to 128 lanes (x in lanes [0,15), zeros elsewhere) via VMEM scratch
    pad_ref[...] = jnp.zeros_like(pad_ref)
    pad_ref[:, 0:INPUT_DIM] = x_ref[...]
    x = pad_ref[...]

    # encoder
    h = relu(linear(x, 0))            # enc1
    h = relu(linear(h, 1))            # enc2
    h = relu(linear(h, 2))            # enc3
    h = relu(linear(h, 3))            # enc4

    # fused fc_log_var / fc_mu: one MXU push; log_var -> lanes [0,2), mu -> [2,4)
    mulv = linear(h, 4)

    # widen eps to lanes [0,2) (reuse scratch; stale x lanes are masked on read)
    pad_ref[:, 0:Z_DIM] = eps_ref[...]
    eps_w = jnp.where(lane < Z_DIM, pad_ref[...], 0.0)

    # reparameterize: eps*std lives in lanes [0,2), lane-aligned with log_var.
    # Padded lanes stay exactly 0 because eps_w is 0 there (no inf/NaN risk).
    std_term = eps_w * jnp.exp(0.5 * mulv)
    # dec1 input: lanes [0,2)=eps*std, [2,4)=mu, 0 elsewhere.  dec1's weight
    # rows are duplicated at both lane groups, so its matmul computes
    # (mu + eps*std) @ W_dec1 == z @ W_dec1.
    v = jnp.where(lane < Z_DIM, std_term, mulv)

    # decoder
    d = relu(linear(v, 5))            # dec1
    d = relu(linear(d, 6))            # dec2
    d = relu(linear(d, 7))            # dec3
    rec = jax.nn.sigmoid(linear(d, 8))   # dec4; real lanes [4,19), others sigmoid(0)=0.5

    # classifier head on mu (slot-9 weight rows live at mu's lanes [2,4))
    c = relu(linear(mulv, 9))         # fc_classifier -> lanes [0,2)
    cls = linear(c, 10)               # classifier    -> lanes [19,29), exactly 0 elsewhere

    # single lane-dense 128-lane writeback: lv|mu already sit at lanes [0,4) in
    # mulv and cls at [19,29); only rec's sigmoid(0)=0.5 padding needs a mask.
    rec_mask = (lane >= REC_OFF) & (lane < REC_OFF + INPUT_DIM)
    out_ref[...] = mulv + jnp.where(rec_mask, rec, 0.0) + cls


# ----------------------------------------------------------------------------
# Parameter construction / packing
# ----------------------------------------------------------------------------
def init_params(key):
    """Deterministic synthetic parameters matching nn.Linear shapes."""
    dims = [
        ("enc1", INPUT_DIM, INPUT_DIM),
        ("enc2", INPUT_DIM, INPUT_DIM),
        ("enc3", INPUT_DIM, H_DIM),
        ("enc4", H_DIM, H_DIM),
        ("fc_mu", H_DIM, Z_DIM),
        ("fc_log_var", H_DIM, Z_DIM),
        ("dec1", Z_DIM, H_DIM),
        ("dec2", H_DIM, H_DIM),
        ("dec3", H_DIM, INPUT_DIM),
        ("dec4", INPUT_DIM, INPUT_DIM),
        ("fc_classifier", Z_DIM, Z_DIM),
        ("classifier", Z_DIM, CLASSES),
    ]
    params = {}
    for name, in_d, out_d in dims:
        key, kw, kb = jax.random.split(key, 3)
        scale = 1.0 / jnp.sqrt(jnp.float32(in_d))
        w = jax.random.uniform(kw, (out_d, in_d), jnp.float32, -scale, scale)
        b = jax.random.uniform(kb, (out_d,), jnp.float32, -scale, scale)
        params[name] = (w, b)
    return params
    # TODO(synk): self.rbf (gpytorch RationalQuadratic) is never used in
    # forward(), so it has no kernel equivalent and is omitted.


def pack_params(params):
    """Pack the 12 Linear layers into one (NL,128,128) weight tensor and one
    (NL,128) bias tensor.  Output columns of the result-producing layers are
    placed directly at their final lanes of the packed output block.

    Slot layout (weights transposed to (in_pad, out_pad), zero padded):
      0..3  enc1..enc4                                      rows/cols at lane 0
      4     fc_log_var cols [0,2) + fc_mu cols [2,4)        <- fused layer
      5     dec1, weight rows DUPLICATED at rows [0,2) and [2,4) (reparameterize)
      6..7  dec2, dec3
      8     dec4, cols [4,19)            (reconstruction lanes)
      9     fc_classifier, rows [2,4) (mu lanes), cols [0,2)
      10    classifier, cols [19,29)     (classification lanes)
    """
    w = jnp.zeros((NL, PAD, PAD), jnp.float32)
    b = jnp.zeros((NL, PAD), jnp.float32)

    def put(w, b, slot, name, row_off=0, col_off=0, set_bias=True):
        wt, bt = params[name]
        wtt = wt.T  # (in, out)
        w = w.at[slot, row_off:row_off + wtt.shape[0],
                 col_off:col_off + wtt.shape[1]].set(wtt)
        if set_bias:
            b = b.at[slot, col_off:col_off + bt.shape[0]].set(bt)
        return w, b

    w, b = put(w, b, 0, "enc1")
    w, b = put(w, b, 1, "enc2")
    w, b = put(w, b, 2, "enc3")
    w, b = put(w, b, 3, "enc4")
    w, b = put(w, b, 4, "fc_log_var", col_off=LV_OFF)
    w, b = put(w, b, 4, "fc_mu", col_off=MU_OFF)
    w, b = put(w, b, 5, "dec1", row_off=0)
    w, b = put(w, b, 5, "dec1", row_off=Z_DIM, set_bias=False)   # duplicated rows
    w, b = put(w, b, 6, "dec2")
    w, b = put(w, b, 7, "dec3")
    w, b = put(w, b, 8, "dec4", col_off=REC_OFF)
    w, b = put(w, b, 9, "fc_classifier", row_off=MU_OFF)
    w, b = put(w, b, 10, "classifier", col_off=CLS_OFF)
    return w, b


# ----------------------------------------------------------------------------
# pallas_call wrapper
# ----------------------------------------------------------------------------
def _round_up(v, m):
    return -(-v // m) * m


def _pick_tb(b_rows):
    """Batch-tile rows: <=512 (near HBM-roofline DMA bursts), multiple of 8,
    and >=2 grid steps whenever the batch allows (feeds both v7x TensorCores)."""
    if b_rows <= 8:
        return 8
    return max(8, min(512, _round_up(-(-b_rows // 2), 8)))


@jax.jit
def vae_forward(x, eps, w_packed, b_packed):
    """x: (B, INPUT_DIM) f32, eps: (B, Z_DIM) f32 standard-normal noise."""
    b_rows = x.shape[0]
    tb = _pick_tb(b_rows)
    nb = -(-b_rows // tb)            # cdiv
    bp = nb * tb
    if bp != b_rows:                 # pad batch rows to a whole number of tiles
        x = jnp.pad(x, ((0, bp - b_rows), (0, 0)))
        eps = jnp.pad(eps, ((0, bp - b_rows), (0, 0)))

    cost = pl.CostEstimate(
        flops=2 * NL * bp * PAD * PAD,
        transcendentals=2 * bp * PAD,                      # exp + sigmoid lanes
        bytes_accessed=4 * (x.size + eps.size + w_packed.size
                            + b_packed.size + bp * PAD),
    )

    out = pl.pallas_call(
        vae_forward_kernel,
        out_shape=jax.ShapeDtypeStruct((bp, PAD), jnp.float32),
        grid=(nb,),
        in_specs=[
            pl.BlockSpec((tb, INPUT_DIM), lambda i: (i, 0)),    # x, unpadded
            pl.BlockSpec((tb, Z_DIM), lambda i: (i, 0)),        # eps, unpadded
            pl.BlockSpec((NL, PAD, PAD), lambda i: (0, 0, 0)),  # weights, VMEM-resident
            pl.BlockSpec((NL, PAD), lambda i: (0, 0)),          # biases, VMEM-resident
        ],
        out_specs=pl.BlockSpec((tb, PAD), lambda i: (i, 0)),    # packed lv|mu|rec|cls
        scratch_shapes=[pltpu.VMEM((tb, PAD), jnp.float32)],    # lane-widening staging
        compiler_params=pltpu.CompilerParams(
            dimension_semantics=("parallel",),   # shards batch tiles across TCs (v7x)
        ),
        cost_estimate=cost,
    )(x, eps, w_packed, b_packed)

    log_var = out[:b_rows, LV_OFF:LV_OFF + Z_DIM]
    mu = out[:b_rows, MU_OFF:MU_OFF + Z_DIM]
    reconstruction = out[:b_rows, REC_OFF:REC_OFF + INPUT_DIM]
    classification = out[:b_rows, CLS_OFF:CLS_OFF + CLASSES]
    return mu, log_var, reconstruction, classification


# ----------------------------------------------------------------------------
# Pure-JAX reference (mirrors the PyTorch forward exactly) for verification
# ----------------------------------------------------------------------------
def reference_forward(x, eps, params):
    def lin(h, name):
        w, b = params[name]
        return h @ w.T + b

    relu = lambda h: jnp.maximum(h, 0.0)
    h = relu(lin(x, "enc1"))
    h = relu(lin(h, "enc2"))
    h = relu(lin(h, "enc3"))
    h = relu(lin(h, "enc4"))
    mu = lin(h, "fc_mu")
    log_var = lin(h, "fc_log_var")
    z = mu + eps * jnp.exp(0.5 * log_var)
    d = relu(lin(z, "dec1"))
    d = relu(lin(d, "dec2"))
    d = relu(lin(d, "dec3"))
    rec = jax.nn.sigmoid(lin(d, "dec4"))
    c = relu(lin(mu, "fc_classifier"))
    cls = lin(c, "classifier")
    return mu, log_var, rec, cls


if __name__ == "__main__":
    key = jax.random.PRNGKey(0)
    k_params, k_x, k_eps = jax.random.split(key, 3)

    params = init_params(k_params)
    w_packed, b_packed = pack_params(params)

    BATCH = 100   # -> tb=56, 2 grid steps; also exercises the row-padding path
    x = jax.random.normal(k_x, (BATCH, INPUT_DIM), jnp.float32)
    # torch.randn_like equivalent noise, supplied explicitly for determinism
    eps = jax.random.normal(k_eps, (BATCH, Z_DIM), jnp.float32)

    outs = vae_forward(x, eps, w_packed, b_packed)
    outs = jax.block_until_ready(outs)

    refs = reference_forward(x, eps, params)
    names = ("mu", "log_var", "reconstruction", "classification")
    for name, o, r in zip(names, outs, refs):
        assert o.shape == r.shape, name
        assert jnp.allclose(o, r, atol=5e-5, rtol=5e-5), f"mismatch vs reference: {name}"

    print("KERNEL_OK")
</pallas_src>

<mosaic_0001>
module attributes {stable_mosaic.version = 11 : i64} {
  func.func @vae_forward_kernel(%arg0: i32, %arg1: memref<56x15xf32, #tpu.memory_space<vmem>>, %arg2: memref<56x2xf32, #tpu.memory_space<vmem>>, %arg3: memref<11x128x128xf32, #tpu.memory_space<vmem>>, %arg4: memref<11x128xf32, #tpu.memory_space<vmem>>, %arg5: memref<56x128xf32, #tpu.memory_space<vmem>>, %arg6: memref<56x128xf32, #tpu.memory_space<vmem>>) attributes {dimension_semantics = [#tpu.dimension_semantics<parallel>], iteration_bounds = array<i64: 2>, scalar_prefetch = 0 : i64, scratch_operands = 1 : i64, tpu.core_type = #tpu.core_type<tc>, window_params = [{transform_indices = @transform_0, window_bounds = array<i64: 56, 15>}, {transform_indices = @transform_1, window_bounds = array<i64: 56, 2>}, {pipeline_mode = #tpu.pipeline_mode<synchronous>, transform_indices = @transform_2, window_bounds = array<i64: 11, 128, 128>}, {pipeline_mode = #tpu.pipeline_mode<synchronous>, transform_indices = @transform_3, window_bounds = array<i64: 11, 128>}, {transform_indices = @transform_4, window_bounds = array<i64: 56, 128>}]} {
    %0 = tpu.iota {dimensions = array<i32: 1>} : vector<56x128xi32>
    %cst = arith.constant 0.000000e+00 : f32
    %1 = vector.broadcast %cst : f32 to vector<56x128xf32>
    %c0 = arith.constant 0 : index
    %c0_0 = arith.constant 0 : index
    %2 = vector.load %arg6[%c0, %c0_0] : memref<56x128xf32, #tpu.memory_space<vmem>>, vector<56x128xf32>
    tpu.vector_store %arg6[%c0, %c0_0], %1 {strides = array<i32>} : memref<56x128xf32, #tpu.memory_space<vmem>>, vector<56x128xf32>,
    %c0_1 = arith.constant 0 : index
    %c0_2 = arith.constant 0 : index
    %3 = vector.load %arg1[%c0_1, %c0_2] : memref<56x15xf32, #tpu.memory_space<vmem>>, vector<56x15xf32>
    %c0_3 = arith.constant 0 : index
    %c0_4 = arith.constant 0 : index
    %4 = vector.load %arg6[%c0_3, %c0_4] : memref<56x128xf32, #tpu.memory_space<vmem>>, vector<56x15xf32>
    tpu.vector_store %arg6[%c0_3, %c0_4], %3 {strides = array<i32>} : memref<56x128xf32, #tpu.memory_space<vmem>>, vector<56x15xf32>,
    %c0_5 = arith.constant 0 : index
    %c0_6 = arith.constant 0 : index
    %5 = vector.load %arg6[%c0_5, %c0_6] : memref<56x128xf32, #tpu.memory_space<vmem>>, vector<56x128xf32>
    %c0_7 = arith.constant 0 : index
    %c0_8 = arith.constant 0 : index
    %c0_9 = arith.constant 0 : index
    %6 = vector.load %arg3[%c0_7, %c0_8, %c0_9] : memref<11x128x128xf32, #tpu.memory_space<vmem>>, vector<1x128x128xf32>
    %7 = vector.shape_cast %6 : vector<1x128x128xf32> to vector<128x128xf32>
    %cst_10 = arith.constant dense<0.000000e+00> : vector<56x128xf32>
    %8 = tpu.matmul %5, %7, %cst_10 {dimension_numbers = #tpu.dot_dimension_numbers<[1], [0], [0], [1], [0, 0, 1, 1], [], []>} : vector<56x128xf32>, vector<128x128xf32>, vector<56x128xf32> -> vector<56x128xf32>
    %c0_11 = arith.constant 0 : index
    %c0_12 = arith.constant 0 : index
    %9 = vector.load %arg4[%c0_11, %c0_12] : memref<11x128xf32, #tpu.memory_space<vmem>>, vector<1x128xf32>
    %10 = vector.broadcast %9 : vector<1x128xf32> to vector<56x128xf32>
    %11 = arith.addf %8, %10 : vector<56x128xf32>
    %cst_13 = arith.constant 0.000000e+00 : f32
    %12 = vector.broadcast %cst_13 : f32 to vector<56x128xf32>
    %13 = arith.maximumf %11, %12 : vector<56x128xf32>
    %c1 = arith.constant 1 : index
    %c0_14 = arith.constant 0 : index
    %c0_15 = arith.constant 0 : index
    %14 = vector.load %arg3[%c1, %c0_14, %c0_15] : memref<11x128x128xf32, #tpu.memory_space<vmem>>, vector<1x128x128xf32>
    %15 = vector.shape_cast %14 : vector<1x128x128xf32> to vector<128x128xf32>
    %cst_16 = arith.constant dense<0.000000e+00> : vector<56x128xf32>
    %16 = tpu.matmul %13, %15, %cst_16 {dimension_numbers = #tpu.dot_dimension_numbers<[1], [0], [0], [1], [0, 0, 1, 1], [], []>} : vector<56x128xf32>, vector<128x128xf32>, vector<56x128xf32> -> vector<56x128xf32>
    %c1_17 = arith.constant 1 : index
    %c0_18 = arith.constant 0 : index
    %17 = vector.load %arg4[%c1_17, %c0_18] : memref<11x128xf32, #tpu.memory_space<vmem>>, vector<1x128xf32>
    %18 = vector.broadcast %17 : vector<1x128xf32> to vector<56x128xf32>
    %19 = arith.addf %16, %18 : vector<56x128xf32>
    %cst_19 = arith.constant 0.000000e+00 : f32
    %20 = vector.broadcast %cst_19 : f32 to vector<56x128xf32>
    %21 = arith.maximumf %19, %20 : vector<56x128xf32>
    %c2 = arith.constant 2 : index
    %c0_20 = arith.constant 0 : index
    %c0_21 = arith.constant 0 : index
    %22 = vector.load %arg3[%c2, %c0_20, %c0_21] : memref<11x128x128xf32, #tpu.memory_space<vmem>>, vector<1x128x128xf32>
    %23 = vector.shape_cast %22 : vector<1x128x128xf32> to vector<128x128xf32>
    %cst_22 = arith.constant dense<0.000000e+00> : vector<56x128xf32>
    %24 = tpu.matmul %21, %23, %cst_22 {dimension_numbers = #tpu.dot_dimension_numbers<[1], [0], [0], [1], [0, 0, 1, 1], [], []>} : vector<56x128xf32>, vector<128x128xf32>, vector<56x128xf32> -> vector<56x128xf32>
    %c2_23 = arith.constant 2 : index
    %c0_24 = arith.constant 0 : index
    %25 = vector.load %arg4[%c2_23, %c0_24] : memref<11x128xf32, #tpu.memory_space<vmem>>, vector<1x128xf32>
    %26 = vector.broadcast %25 : vector<1x128xf32> to vector<56x128xf32>
    %27 = arith.addf %24, %26 : vector<56x128xf32>
    %cst_25 = arith.constant 0.000000e+00 : f32
    %28 = vector.broadcast %cst_25 : f32 to vector<56x128xf32>
    %29 = arith.maximumf %27, %28 : vector<56x128xf32>
    %c3 = arith.constant 3 : index
    %c0_26 = arith.constant 0 : index
    %c0_27 = arith.constant 0 : index
    %30 = vector.load %arg3[%c3, %c0_26, %c0_27] : memref<11x128x128xf32, #tpu.memory_space<vmem>>, vector<1x128x128xf32>
    %31 = vector.shape_cast %30 : vector<1x128x128xf32> to vector<128x128xf32>
    %cst_28 = arith.constant dense<0.000000e+00> : vector<56x128xf32>
    %32 = tpu.matmul %29, %31, %cst_28 {dimension_numbers = #tpu.dot_dimension_numbers<[1], [0], [0], [1], [0, 0, 1, 1], [], []>} : vector<56x128xf32>, vector<128x128xf32>, vector<56x128xf32> -> vector<56x128xf32>
    %c3_29 = arith.constant 3 : index
    %c0_30 = arith.constant 0 : index
    %33 = vector.load %arg4[%c3_29, %c0_30] : memref<11x128xf32, #tpu.memory_space<vmem>>, vector<1x128xf32>
    %34 = vector.broadcast %33 : vector<1x128xf32> to vector<56x128xf32>
    %35 = arith.addf %32, %34 : vector<56x128xf32>
    %cst_31 = arith.constant 0.000000e+00 : f32
    %36 = vector.broadcast %cst_31 : f32 to vector<56x128xf32>
    %37 = arith.maximumf %35, %36 : vector<56x128xf32>
    %c4 = arith.constant 4 : index
    %c0_32 = arith.constant 0 : index
    %c0_33 = arith.constant 0 : index
    %38 = vector.load %arg3[%c4, %c0_32, %c0_33] : memref<11x128x128xf32, #tpu.memory_space<vmem>>, vector<1x128x128xf32>
    %39 = vector.shape_cast %38 : vector<1x128x128xf32> to vector<128x128xf32>
    %cst_34 = arith.constant dense<0.000000e+00> : vector<56x128xf32>
    %40 = tpu.matmul %37, %39, %cst_34 {dimension_numbers = #tpu.dot_dimension_numbers<[1], [0], [0], [1], [0, 0, 1, 1], [], []>} : vector<56x128xf32>, vector<128x128xf32>, vector<56x128xf32> -> vector<56x128xf32>
    %c4_35 = arith.constant 4 : index
    %c0_36 = arith.constant 0 : index
    %41 = vector.load %arg4[%c4_35, %c0_36] : memref<11x128xf32, #tpu.memory_space<vmem>>, vector<1x128xf32>
    %42 = vector.broadcast %41 : vector<1x128xf32> to vector<56x128xf32>
    %43 = arith.addf %40, %42 : vector<56x128xf32>
    %c0_37 = arith.constant 0 : index
    %c0_38 = arith.constant 0 : index
    %44 = vector.load %arg2[%c0_37, %c0_38] : memref<56x2xf32, #tpu.memory_space<vmem>>, vector<56x2xf32>
    %c0_39 = arith.constant 0 : index
    %c0_40 = arith.constant 0 : index
    %45 = vector.load %arg6[%c0_39, %c0_40] : memref<56x128xf32, #tpu.memory_space<vmem>>, vector<56x2xf32>
    tpu.vector_store %arg6[%c0_39, %c0_40], %44 {strides = array<i32>} : memref<56x128xf32, #tpu.memory_space<vmem>>, vector<56x2xf32>,
    %c2_i32 = arith.constant 2 : i32
    %46 = vector.broadcast %c2_i32 : i32 to vector<56x128xi32>
    %47 = arith.cmpi slt, %0, %46 : vector<56x128xi32>
    %c0_41 = arith.constant 0 : index
    %c0_42 = arith.constant 0 : index
    %48 = vector.load %arg6[%c0_41, %c0_42] : memref<56x128xf32, #tpu.memory_space<vmem>>, vector<56x128xf32>
    %cst_43 = arith.constant 0.000000e+00 : f32
    %49 = vector.broadcast %cst_43 : f32 to vector<56x128xf32>
    %50 = arith.select %47, %48, %49 : vector<56x128xi1>, vector<56x128xf32>
    %cst_44 = arith.constant 5.000000e-01 : f32
    %51 = vector.broadcast %cst_44 : f32 to vector<56x128xf32>
    %52 = arith.mulf %51, %43 : vector<56x128xf32>
    %53 = math.exp %52 : vector<56x128xf32>
    %54 = arith.mulf %50, %53 : vector<56x128xf32>
    %c2_i32_45 = arith.constant 2 : i32
    %55 = vector.broadcast %c2_i32_45 : i32 to vector<56x128xi32>
    %56 = arith.cmpi slt, %0, %55 : vector<56x128xi32>
    %57 = arith.select %56, %54, %43 : vector<56x128xi1>, vector<56x128xf32>
    %c5 = arith.constant 5 : index
    %c0_46 = arith.constant 0 : index
    %c0_47 = arith.constant 0 : index
    %58 = vector.load %arg3[%c5, %c0_46, %c0_47] : memref<11x128x128xf32, #tpu.memory_space<vmem>>, vector<1x128x128xf32>
    %59 = vector.shape_cast %58 : vector<1x128x128xf32> to vector<128x128xf32>
    %cst_48 = arith.constant dense<0.000000e+00> : vector<56x128xf32>
    %60 = tpu.matmul %57, %59, %cst_48 {dimension_numbers = #tpu.dot_dimension_numbers<[1], [0], [0], [1], [0, 0, 1, 1], [], []>} : vector<56x128xf32>, vector<128x128xf32>, vector<56x128xf32> -> vector<56x128xf32>
    %c5_49 = arith.constant 5 : index
    %c0_50 = arith.constant 0 : index
    %61 = vector.load %arg4[%c5_49, %c0_50] : memref<11x128xf32, #tpu.memory_space<vmem>>, vector<1x128xf32>
    %62 = vector.broadcast %61 : vector<1x128xf32> to vector<56x128xf32>
    %63 = arith.addf %60, %62 : vector<56x128xf32>
    %cst_51 = arith.constant 0.000000e+00 : f32
    %64 = vector.broadcast %cst_51 : f32 to vector<56x128xf32>
    %65 = arith.maximumf %63, %64 : vector<56x128xf32>
    %c6 = arith.constant 6 : index
    %c0_52 = arith.constant 0 : index
    %c0_53 = arith.constant 0 : index
    %66 = vector.load %arg3[%c6, %c0_52, %c0_53] : memref<11x128x128xf32, #tpu.memory_space<vmem>>, vector<1x128x128xf32>
    %67 = vector.shape_cast %66 : vector<1x128x128xf32> to vector<128x128xf32>
    %cst_54 = arith.constant dense<0.000000e+00> : vector<56x128xf32>
    %68 = tpu.matmul %65, %67, %cst_54 {dimension_numbers = #tpu.dot_dimension_numbers<[1], [0], [0], [1], [0, 0, 1, 1], [], []>} : vector<56x128xf32>, vector<128x128xf32>, vector<56x128xf32> -> vector<56x128xf32>
    %c6_55 = arith.constant 6 : index
    %c0_56 = arith.constant 0 : index
    %69 = vector.load %arg4[%c6_55, %c0_56] : memref<11x128xf32, #tpu.memory_space<vmem>>, vector<1x128xf32>
    %70 = vector.broadcast %69 : vector<1x128xf32> to vector<56x128xf32>
    %71 = arith.addf %68, %70 : vector<56x128xf32>
    %cst_57 = arith.constant 0.000000e+00 : f32
    %72 = vector.broadcast %cst_57 : f32 to vector<56x128xf32>
    %73 = arith.maximumf %71, %72 : vector<56x128xf32>
    %c7 = arith.constant 7 : index
    %c0_58 = arith.constant 0 : index
    %c0_59 = arith.constant 0 : index
    %74 = vector.load %arg3[%c7, %c0_58, %c0_59] : memref<11x128x128xf32, #tpu.memory_space<vmem>>, vector<1x128x128xf32>
    %75 = vector.shape_cast %74 : vector<1x128x128xf32> to vector<128x128xf32>
    %cst_60 = arith.constant dense<0.000000e+00> : vector<56x128xf32>
    %76 = tpu.matmul %73, %75, %cst_60 {dimension_numbers = #tpu.dot_dimension_numbers<[1], [0], [0], [1], [0, 0, 1, 1], [], []>} : vector<56x128xf32>, vector<128x128xf32>, vector<56x128xf32> -> vector<56x128xf32>
    %c7_61 = arith.constant 7 : index
    %c0_62 = arith.constant 0 : index
    %77 = vector.load %arg4[%c7_61, %c0_62] : memref<11x128xf32, #tpu.memory_space<vmem>>, vector<1x128xf32>
    %78 = vector.broadcast %77 : vector<1x128xf32> to vector<56x128xf32>
    %79 = arith.addf %76, %78 : vector<56x128xf32>
    %cst_63 = arith.constant 0.000000e+00 : f32
    %80 = vector.broadcast %cst_63 : f32 to vector<56x128xf32>
    %81 = arith.maximumf %79, %80 : vector<56x128xf32>
    %c8 = arith.constant 8 : index
    %c0_64 = arith.constant 0 : index
    %c0_65 = arith.constant 0 : index
    %82 = vector.load %arg3[%c8, %c0_64, %c0_65] : memref<11x128x128xf32, #tpu.memory_space<vmem>>, vector<1x128x128xf32>
    %83 = vector.shape_cast %82 : vector<1x128x128xf32> to vector<128x128xf32>
    %cst_66 = arith.constant dense<0.000000e+00> : vector<56x128xf32>
    %84 = tpu.matmul %81, %83, %cst_66 {dimension_numbers = #tpu.dot_dimension_numbers<[1], [0], [0], [1], [0, 0, 1, 1], [], []>} : vector<56x128xf32>, vector<128x128xf32>, vector<56x128xf32> -> vector<56x128xf32>
    %c8_67 = arith.constant 8 : index
    %c0_68 = arith.constant 0 : index
    %85 = vector.load %arg4[%c8_67, %c0_68] : memref<11x128xf32, #tpu.memory_space<vmem>>, vector<1x128xf32>
    %86 = vector.broadcast %85 : vector<1x128xf32> to vector<56x128xf32>
    %87 = arith.addf %84, %86 : vector<56x128xf32>
    %88 = arith.negf %87 : vector<56x128xf32>
    %89 = math.exp %88 : vector<56x128xf32>
    %cst_69 = arith.constant 1.000000e+00 : f32
    %90 = vector.broadcast %cst_69 : f32 to vector<56x128xf32>
    %91 = arith.addf %90, %89 : vector<56x128xf32>
    %92 = arith.divf %90, %91 : vector<56x128xf32>
    %c9 = arith.constant 9 : index
    %c0_70 = arith.constant 0 : index
    %c0_71 = arith.constant 0 : index
    %93 = vector.load %arg3[%c9, %c0_70, %c0_71] : memref<11x128x128xf32, #tpu.memory_space<vmem>>, vector<1x128x128xf32>
    %94 = vector.shape_cast %93 : vector<1x128x128xf32> to vector<128x128xf32>
    %cst_72 = arith.constant dense<0.000000e+00> : vector<56x128xf32>
    %95 = tpu.matmul %43, %94, %cst_72 {dimension_numbers = #tpu.dot_dimension_numbers<[1], [0], [0], [1], [0, 0, 1, 1], [], []>} : vector<56x128xf32>, vector<128x128xf32>, vector<56x128xf32> -> vector<56x128xf32>
    %c9_73 = arith.constant 9 : index
    %c0_74 = arith.constant 0 : index
    %96 = vector.load %arg4[%c9_73, %c0_74] : memref<11x128xf32, #tpu.memory_space<vmem>>, vector<1x128xf32>
    %97 = vector.broadcast %96 : vector<1x128xf32> to vector<56x128xf32>
    %98 = arith.addf %95, %97 : vector<56x128xf32>
    %cst_75 = arith.constant 0.000000e+00 : f32
    %99 = vector.broadcast %cst_75 : f32 to vector<56x128xf32>
    %100 = arith.maximumf %98, %99 : vector<56x128xf32>
    %c10 = arith.constant 10 : index
    %c0_76 = arith.constant 0 : index
    %c0_77 = arith.constant 0 : index
    %101 = vector.load %arg3[%c10, %c0_76, %c0_77] : memref<11x128x128xf32, #tpu.memory_space<vmem>>, vector<1x128x128xf32>
    %102 = vector.shape_cast %101 : vector<1x128x128xf32> to vector<128x128xf32>
    %cst_78 = arith.constant dense<0.000000e+00> : vector<56x128xf32>
    %103 = tpu.matmul %100, %102, %cst_78 {dimension_numbers = #tpu.dot_dimension_numbers<[1], [0], [0], [1], [0, 0, 1, 1], [], []>} : vector<56x128xf32>, vector<128x128xf32>, vector<56x128xf32> -> vector<56x128xf32>
    %c10_79 = arith.constant 10 : index
    %c0_80 = arith.constant 0 : index
    %104 = vector.load %arg4[%c10_79, %c0_80] : memref<11x128xf32, #tpu.memory_space<vmem>>, vector<1x128xf32>
    %105 = vector.broadcast %104 : vector<1x128xf32> to vector<56x128xf32>
    %106 = arith.addf %103, %105 : vector<56x128xf32>
    %c4_i32 = arith.constant 4 : i32
    %107 = vector.broadcast %c4_i32 : i32 to vector<56x128xi32>
    %108 = arith.cmpi sge, %0, %107 : vector<56x128xi32>
    %c19_i32 = arith.constant 19 : i32
    %109 = vector.broadcast %c19_i32 : i32 to vector<56x128xi32>
    %110 = arith.cmpi slt, %0, %109 : vector<56x128xi32>
    %111 = arith.andi %108, %110 : vector<56x128xi1>
    %cst_81 = arith.constant 0.000000e+00 : f32
    %112 = vector.broadcast %cst_81 : f32 to vector<56x128xf32>
    %113 = arith.select %111, %92, %112 : vector<56x128xi1>, vector<56x128xf32>
    %114 = arith.addf %43, %113 : vector<56x128xf32>
    %115 = arith.addf %114, %106 : vector<56x128xf32>
    %c0_82 = arith.constant 0 : index
    %c0_83 = arith.constant 0 : index
    %116 = vector.load %arg5[%c0_82, %c0_83] : memref<56x128xf32, #tpu.memory_space<vmem>>, vector<56x128xf32>
    tpu.vector_store %arg5[%c0_82, %c0_83], %115 {strides = array<i32>} : memref<56x128xf32, #tpu.memory_space<vmem>>, vector<56x128xf32>,
    return
  }
  func.func @transform_0(%arg0: i32) -> (i32, i32) {
    %c0_i32 = arith.constant 0 : i32
    %c0_i32_0 = arith.constant 0 : i32
    return %arg0, %c0_i32 : i32, i32
  }
  func.func @transform_1(%arg0: i32) -> (i32, i32) {
    %c0_i32 = arith.constant 0 : i32
    %c0_i32_0 = arith.constant 0 : i32
    return %arg0, %c0_i32 : i32, i32
  }
  func.func @transform_2(%arg0: i32) -> (i32, i32, i32) {
    %c0_i32 = arith.constant 0 : i32
    %c0_i32_0 = arith.constant 0 : i32
    %c0_i32_1 = arith.constant 0 : i32
    %c0_i32_2 = arith.constant 0 : i32
    return %c0_i32, %c0_i32_0, %c0_i32_1 : i32, i32, i32
  }
  func.func @transform_3(%arg0: i32) -> (i32, i32) {
    %c0_i32 = arith.constant 0 : i32
    %c0_i32_0 = arith.constant 0 : i32
    %c0_i32_1 = arith.constant 0 : i32
    return %c0_i32, %c0_i32_0 : i32, i32
  }
  func.func @transform_4(%arg0: i32) -> (i32, i32) {
    %c0_i32 = arith.constant 0 : i32
    %c0_i32_0 = arith.constant 0 : i32
    return %arg0, %c0_i32 : i32, i32
  }
}

</mosaic_0001>

<llo_original>
// kernel: vae_forward.1
$region0: #{vae_forward.1}
  #allocation0 [shape = 'u32[]', space=smem, size = 0x4, offset = 0x4, fixed_abs, tag = 'smem constant byte address 0x4 - core index']
  #allocation1 [shape = 'u32[72,128]{1,0:T(1,128)}', space=vmem, size = 0x9000, scoped, tag = 'internal scratch']
  #allocation2 [shape = 'f32[56,128]{1,0:T(8,128)}', space=vmem, size = 0x7000, scoped, tag = 'scratch operand']
  %s0 = inlined_call_operand.vmem [shape: f32[112,15], index: 0, kind: input, shape index: {}]
  %s1 = inlined_call_operand.vmem [shape: f32[112,2], index: 1, kind: input, shape index: {}]
  %s2 = inlined_call_operand.hbm [shape: f32[11,128,128], index: 2, kind: input, shape index: {}]
  %s3 = inlined_call_operand.vmem [shape: f32[11,128], index: 3, kind: input, shape index: {}]
  %s4 = inlined_call_operand.vmem [shape: f32[112,128], index: 4, kind: output, shape index: {}]
  %s5 = sld [smem:[#allocation0]]
  $region53: #{vae_forward.1} parent=0
    _
  %s7 = ssub.s32 1, %s5
  %s8 = scalar_select 0, %s7, %s5
  $region1: #{vae_forward.1} parent=0
    #allocation3 [shape = 'u8[720896]{0}', space=vmem, size = 0xb0000, scoped, tag = 'input window, operand 2, single buffered']
    #allocation4 [shape = 's32[2]{0}', space=sflag, size = 0x8, scoped, tag = 'scoped memory for vae_forward.1']
    %9 = vsyncpa [#allocation4], 0
    loop: start=0, step=1, limit=4
    $region2: #{vae_forward.1} parent=1 // loop_pre_header
      _
    $region3: #{vae_forward.1} parent=1 // loop_header
      %s11 = sphi 0, %s15
      %p12 = scmp.ge.s32.totalorder %s11, 4
      %s21 = sphi 0, %s23
      %s24 = sphi 0, %s21
      %s25 = sphi 0, %s24
      %s41 = sphi 0, %s25
      %s47 = sphi 0, %s49
      %s50 = sphi 0, %s47
      %s51 = sphi 0, %s50
      %s67 = sphi 0, %s51
      %s71 = sphi 0, %s71
      %s73 = sphi 0, %s71
      %s74 = sphi 0, %s73
      %s88 = sphi 0, %s74
      %s92 = sphi 0, %s92
      %s94 = sphi 0, %s92
      %s95 = sphi 0, %s94
      %s109 = sphi 0, %s95
      %s115 = sphi 0, %s117
      %s118 = sphi 0, %s115
      %s119 = sphi 0, %s118
      %s135 = sphi 0, %s119
    $region4: #{vae_forward.1} parent=1 // loop_header_branch
      %14 = sbr.rel (%p12) target = $region8
    $region5: #{vae_forward.1} parent=1 // loop_body
      %s16 = ssub.s32 %s11, 1
      %s17 = ssub.s32 %s11, 2
      %s18 = sadd.s32 %s11, 1
      %s19 = ssub.s32 %s11, %s18
      %p20 = scmp.eq.s32.totalorder %s19, 0
      %s22 = sadd.s32 %s21, 1
      %s23 = scalar_select %p20, %s21, %s22
      %p26 = pneg %p20
      %p27 = scmp.eq.s32.totalorder %s11, 1
      %p28 = por %p26, %p27
      %p29 = scmp.ne.s32.totalorder %s21, %s24
      %p30 = scmp.eq.s32.totalorder %s11, 0
      %p31 = por %p29, %p30
      %p32 = scmp.ne.s32.totalorder %s21, %s24
      %p33 = scmp.eq.s32.totalorder %s16, 1
      %p34 = por %p32, %p33
      %p35 = scmp.ne.s32.totalorder %s24, %s25
      %p36 = scmp.eq.s32.totalorder %s16, 0
      %p37 = por %p35, %p36
      %p38 = scmp.ne.s32.totalorder %s24, %s25
      %p39 = scmp.eq.s32.totalorder %s17, 1
      %p40 = por %p38, %p39
      %p42 = scmp.ne.s32.totalorder %s25, %s41
      %p43 = scmp.eq.s32.totalorder %s17, 0
      %p44 = por %p42, %p43
      %s45 = ssub.s32 %s11, %s18
      %p46 = scmp.eq.s32.totalorder %s45, 0
      %s48 = sadd.s32 %s47, 1
      %s49 = scalar_select %p46, %s47, %s48
      %p52 = pneg %p46
      %p53 = scmp.eq.s32.totalorder %s11, 1
      %p54 = por %p52, %p53
      %p55 = scmp.ne.s32.totalorder %s47, %s50
      %p56 = scmp.eq.s32.totalorder %s11, 0
      %p57 = por %p55, %p56
      %p58 = scmp.ne.s32.totalorder %s47, %s50
      %p59 = scmp.eq.s32.totalorder %s16, 1
      %p60 = por %p58, %p59
      %p61 = scmp.ne.s32.totalorder %s50, %s51
      %p62 = scmp.eq.s32.totalorder %s16, 0
      %p63 = por %p61, %p62
      %p64 = scmp.ne.s32.totalorder %s50, %s51
      %p65 = scmp.eq.s32.totalorder %s17, 1
      %p66 = por %p64, %p65
      %p68 = scmp.ne.s32.totalorder %s51, %s67
      %p69 = scmp.eq.s32.totalorder %s17, 0
      %p70 = por %p68, %p69
      %s72 = sadd.s32 %s71, 1
      %p75 = scmp.eq.s32.totalorder %s11, 1
      %p76 = scmp.ne.s32.totalorder %s71, %s73
      %p77 = scmp.eq.s32.totalorder %s11, 0
      %p78 = por %p76, %p77
      %p79 = scmp.ne.s32.totalorder %s71, %s73
      %p80 = scmp.eq.s32.totalorder %s16, 1
      %p81 = por %p79, %p80
      %p82 = scmp.ne.s32.totalorder %s73, %s74
      %p83 = scmp.eq.s32.totalorder %s16, 0
      %p84 = por %p82, %p83
      %p85 = scmp.ne.s32.totalorder %s73, %s74
      %p86 = scmp.eq.s32.totalorder %s17, 1
      %p87 = por %p85, %p86
      %p89 = scmp.ne.s32.totalorder %s74, %s88
      %p90 = scmp.eq.s32.totalorder %s17, 0
      %p91 = por %p89, %p90
      %s93 = sadd.s32 %s92, 1
      %p96 = scmp.eq.s32.totalorder %s11, 1
      %p97 = scmp.ne.s32.totalorder %s92, %s94
      %p98 = scmp.eq.s32.totalorder %s11, 0
      %p99 = por %p97, %p98
      %p100 = scmp.ne.s32.totalorder %s92, %s94
      %p101 = scmp.eq.s32.totalorder %s16, 1
      %p102 = por %p100, %p101
      %p103 = scmp.ne.s32.totalorder %s94, %s95
      %p104 = scmp.eq.s32.totalorder %s16, 0
      %p105 = por %p103, %p104
      %p106 = scmp.ne.s32.totalorder %s94, %s95
      %p107 = scmp.eq.s32.totalorder %s17, 1
      %p108 = por %p106, %p107
      %p110 = scmp.ne.s32.totalorder %s95, %s109
      %p111 = scmp.eq.s32.totalorder %s17, 0
      %p112 = por %p110, %p111
      %s113 = ssub.s32 %s11, %s18
      %p114 = scmp.eq.s32.totalorder %s113, 0
      %s116 = sadd.s32 %s115, 1
      %s117 = scalar_select %p114, %s115, %s116
      %p120 = pneg %p114
      %p121 = scmp.eq.s32.totalorder %s11, 1
      %p122 = por %p120, %p121
      %p123 = scmp.ne.s32.totalorder %s115, %s118
      %p124 = scmp.eq.s32.totalorder %s11, 0
      %p125 = por %p123, %p124
      %p126 = scmp.ne.s32.totalorder %s115, %s118
      %p127 = scmp.eq.s32.totalorder %s16, 1
      %p128 = por %p126, %p127
      %p129 = scmp.ne.s32.totalorder %s118, %s119
      %p130 = scmp.eq.s32.totalorder %s16, 0
      %p131 = por %p129, %p130
      %p132 = scmp.ne.s32.totalorder %s118, %s119
      %p133 = scmp.eq.s32.totalorder %s17, 1
      %p134 = por %p132, %p133
      %p136 = scmp.ne.s32.totalorder %s119, %s135
      %p137 = scmp.eq.s32.totalorder %s17, 0
      %p138 = por %p136, %p137
      %p139 = scmp.le.s32.totalorder 1, %s11
      %p140 = scmp.lt.s32.totalorder %s11, 3
      %p141 = pnand %p139, %p140
      %p142 = pneg %p141
      // Predicated region
      $region9: #{vae_forward.1} parent=5 // pred_check
        _
      $region10: #{vae_forward.1} parent=5 // pred_check_branch
        %144 = sbr.rel (%p141) target = $region12
      $region11: #{vae_forward.1} parent=5 // pred_region
        %s145 = ssub.s32 %s11, 1
        // Predicated region
        $region13: #{vae_forward.1} parent=11 // pred_check
          %p146 = pneg %p84
        $region14: #{vae_forward.1} parent=11 // pred_check_branch
          %148 = sbr.rel (%p146) target = $region16
        $region15: #{vae_forward.1} parent=11 // pred_region
          %150 = vsyncadd [#allocation4], 0
          %s151 = sshll.u32 %s2, 4
          %s152 = int_to_ptr.hbm [resolvable:$true] %s151
          %s153 = sshll.u32 [#allocation3], 4
          %s154 = int_to_ptr.vmem [resolvable:$true] %s153
          %159 = dma.hbm_to_vmem [thread:$0]  %s152, 22528, %s154, [#allocation4], 128, 128, 8
        $region16: #{vae_forward.1} parent=11 // pred_fallthru
          _
        // Predicated region
        $region17: #{vae_forward.1} parent=11 // pred_check
          %p160 = pneg %p105
        $region18: #{vae_forward.1} parent=11 // pred_check_branch
          %162 = sbr.rel (%p160) target = $region20
        $region19: #{vae_forward.1} parent=11 // pred_region
          _
        $region20: #{vae_forward.1} parent=11 // pred_fallthru
          _
      $region12: #{vae_forward.1} parent=5 // pred_fallthru
        _
      %p163 = scmp.lt.s32.totalorder %s11, 2
      // Predicated region
      $region21: #{vae_forward.1} parent=5 // pred_check
        %p164 = pneg %p163
      $region22: #{vae_forward.1} parent=5 // pred_check_branch
        %166 = sbr.rel (%p164) target = $region24
      $region23: #{vae_forward.1} parent=5 // pred_region
        // Predicated region
        $region25: #{vae_forward.1} parent=23 // pred_check
          %p167 = pneg %p31
        $region26: #{vae_forward.1} parent=23 // pred_check_branch
          %169 = sbr.rel (%p167) target = $region28
        $region27: #{vae_forward.1} parent=23 // pred_region
          %s170 = smul.u32 7, %s11
          %p171 = scmp.lt.s32.totalorder %s170, 13
          %s172 = scalar_select %p171, %s170, 13
          %s173 = smul.addr %s172, 8
          %s174 = scalar_lea.vmem %s0, %s173
          %s175 = smul.u32 7, %s11
        $region28: #{vae_forward.1} parent=23 // pred_fallthru
          _
        // Predicated region
        $region29: #{vae_forward.1} parent=23 // pred_check
          %p176 = pneg %p57
        $region30: #{vae_forward.1} parent=23 // pred_check_branch
          %178 = sbr.rel (%p176) target = $region32
        $region31: #{vae_forward.1} parent=23 // pred_region
          %s179 = smul.u32 7, %s11
          %p180 = scmp.lt.s32.totalorder %s179, 13
          %s181 = scalar_select %p180, %s179, 13
          %s182 = smul.addr %s181, 8
          %s183 = scalar_lea.vmem %s1, %s182
          %s184 = smul.u32 7, %s11
        $region32: #{vae_forward.1} parent=23 // pred_fallthru
          _
      $region24: #{vae_forward.1} parent=5 // pred_fallthru
        _
      %p185 = scmp.le.s32.totalorder 1, %s11
      %p186 = scmp.lt.s32.totalorder %s11, 3
      %p187 = pnand %p185, %p186
      %p188 = pneg %p187
      // Predicated region
      $region33: #{vae_forward.1} parent=5 // pred_check
        _
      $region34: #{vae_forward.1} parent=5 // pred_check_branch
        %190 = sbr.rel (%p187) target = $region36
      $region35: #{vae_forward.1} parent=5 // pred_region
        %s191 = ssub.s32 %s11, 1
        // Predicated region
        $region37: #{vae_forward.1} parent=35 // pred_check
          %p192 = pneg %p84
        $region38: #{vae_forward.1} parent=35 // pred_check_branch
          %194 = sbr.rel (%p192) target = $region40
        $region39: #{vae_forward.1} parent=35 // pred_region
          %196 = dma.done [#allocation4], 22528
        $region40: #{vae_forward.1} parent=35 // pred_fallthru
          _
        %s197 = smul.u32 7, %s16
        %p198 = scmp.lt.s32.totalorder %s197, 13
        %s199 = scalar_select %p198, %s197, 13
        %s200 = smul.addr %s199, 8
        %s201 = scalar_lea.vmem %s0, %s200
        %p202 = pneg %p37
        %p203 = pneg %p34
        %s204 = smul.u32 7, %s16
        %p205 = scmp.lt.s32.totalorder %s204, 13
        %s206 = scalar_select %p205, %s204, 13
        %s207 = smul.addr %s206, 8
        %s208 = scalar_lea.vmem %s1, %s207
        %p209 = pneg %p63
        %p210 = pneg %p60
        %p211 = pneg %p84
        %p212 = pneg %p81
        %p213 = pneg %p105
        %p214 = pneg %p102
        %p215 = pneg %p131
        %p216 = pneg %p128
        %s217 = smul.u32 7, %s16
        %p218 = scmp.lt.s32.totalorder %s217, 13
        %s219 = scalar_select %p218, %s217, 13
        %s220 = smul.addr %s219, 8
        %s221 = scalar_lea.vmem %s4, %s220
        %s222 = smul.u32 7, %s16
        %p223 = scmp.lt.s32.totalorder %s222, 13
        %s224 = scalar_select %p223, %s222, 13
        %s225 = smul.addr %s224, 8
        %s226 = scalar_lea.vmem %s0, %s225
        %s227 = smul.u32 7, %s16
        %s228 = smul.u32 7, %s16
        %p229 = scmp.lt.s32.totalorder %s228, 13
        %s230 = scalar_select %p229, %s228, 13
        %s231 = smul.addr %s230, 8
        %s232 = scalar_lea.vmem %s1, %s231
        %s233 = smul.u32 7, %s16
        %s234 = smul.u32 7, %s16
        %p235 = scmp.lt.s32.totalorder %s234, 13
        %s236 = scalar_select %p235, %s234, 13
        %s237 = smul.addr %s236, 8
        %s238 = scalar_lea.vmem %s4, %s237
        %s239 = smul.u32 7, %s16
        %v240 = vlaneseq
        %v241 = vand.u32 %v240, 127
        %242 = vst [vmem:[#allocation2] sm:$0xff] 0.0
        %243 = vst [vmem:[#allocation2 + $0x8] sm:$0xff] 0.0
        %244 = vst [vmem:[#allocation2 + $0x10] sm:$0xff] 0.0
        %245 = vst [vmem:[#allocation2 + $0x18] sm:$0xff] 0.0
        %246 = vst [vmem:[#allocation2 + $0x20] sm:$0xff] 0.0
        %247 = vst [vmem:[#allocation2 + $0x28] sm:$0xff] 0.0
        %248 = vst [vmem:[#allocation2 + $0x30] sm:$0xff] 0.0
        %v249 = vld [vmem:[%s226] sm:$0xff]
        %v250 = vld [vmem:[%s226 + $0x8] sm:$0xff]
        %v251 = vld [vmem:[%s226 + $0x10] sm:$0xff]
        %v252 = vld [vmem:[%s226 + $0x18] sm:$0xff]
        %v253 = vld [vmem:[%s226 + $0x20] sm:$0xff]
        %v254 = vld [vmem:[%s226 + $0x28] sm:$0xff]
        %v255 = vld [vmem:[%s226 + $0x30] sm:$0xff]
        %vm256 = vcmask 121856
        %257 = vst.msk [vmem:[#allocation2] sm:$0xff] %vm256, %v249
        %258 = vst.msk [vmem:[#allocation2 + $0x8] sm:$0xff] %vm256, %v250
        %259 = vst.msk [vmem:[#allocation2 + $0x10] sm:$0xff] %vm256, %v251
        %260 = vst.msk [vmem:[#allocation2 + $0x18] sm:$0xff] %vm256, %v252
        %261 = vst.msk [vmem:[#allocation2 + $0x20] sm:$0xff] %vm256, %v253
        %262 = vst.msk [vmem:[#allocation2 + $0x28] sm:$0xff] %vm256, %v254
        %263 = vst.msk [vmem:[#allocation2 + $0x30] sm:$0xff] %vm256, %v255
        %v264 = vld [vmem:[#allocation2] sm:$0xff]
        %v265 = vld [vmem:[#allocation2 + $0x8] sm:$0xff]
        %v266 = vld [vmem:[#allocation2 + $0x10] sm:$0xff]
        %v267 = vld [vmem:[#allocation2 + $0x18] sm:$0xff]
        %v268 = vld [vmem:[#allocation2 + $0x20] sm:$0xff]
        %v269 = vld [vmem:[#allocation2 + $0x28] sm:$0xff]
        %v270 = vld [vmem:[#allocation2 + $0x30] sm:$0xff]
        %v271 = vld [vmem:[#allocation3] sm:$0xff]
        %v272 = vld [vmem:[#allocation3 + $0x8] sm:$0xff]
        %v273 = vld [vmem:[#allocation3 + $0x10] sm:$0xff]
        %v274 = vld [vmem:[#allocation3 + $0x18] sm:$0xff]
        %v275 = vld [vmem:[#allocation3 + $0x20] sm:$0xff]
        %v276 = vld [vmem:[#allocation3 + $0x28] sm:$0xff]
        %v277 = vld [vmem:[#allocation3 + $0x30] sm:$0xff]
        %v278 = vld [vmem:[#allocation3 + $0x38] sm:$0xff]
        %v279 = vld [vmem:[#allocation3 + $0x40] sm:$0xff]
        %v280 = vld [vmem:[#allocation3 + $0x48] sm:$0xff]
        %v281 = vld [vmem:[#allocation3 + $0x50] sm:$0xff]
        %v282 = vld [vmem:[#allocation3 + $0x58] sm:$0xff]
        %v283 = vld [vmem:[#allocation3 + $0x60] sm:$0xff]
        %v284 = vld [vmem:[#allocation3 + $0x68] sm:$0xff]
        %v285 = vld [vmem:[#allocation3 + $0x70] sm:$0xff]
        %v286 = vld [vmem:[#allocation3 + $0x78] sm:$0xff]
        %v287 = vld [vmem:[%s3] sm:$0x1]
        %v288 = vperm.slane %v287, 0
        %289 = vmatpush.msra.mxu0 %v286
        %290 = vmatpush.msra.mxu0 %v285
        %291 = vmatpush.msra.mxu0 %v284
        %292 = vmatpush.msra.mxu0 %v283
        %293 = vmatpush.msra.mxu0 %v282
        %294 = vmatpush.msra.mxu0 %v281
        %295 = vmatpush.msra.mxu0 %v280
        %296 = vmatpush.msra.mxu0 %v279
        %297 = vmatpush.msra.mxu0 %v278
        %298 = vmatpush.msra.mxu0 %v277
        %299 = vmatpush.msra.mxu0 %v276
        %300 = vmatpush.msra.mxu0 %v275
        %301 = vmatpush.msra.mxu0 %v274
        %302 = vmatpush.msra.mxu0 %v273
        %303 = vmatpush.msra.mxu0 %v272
        %304 = vmatpush.msra.mxu0 %v271
        %305 = vmatmul.f32.gmra.mxu0 %v264
        %v306 = vpop.f32.mrf.mxu0
        %v307 = vadd.f32 %v288, %v306
        %308 = vmatmul.f32.gmra.mxu0 %v265
        %v309 = vpop.f32.mrf.mxu0
        %v310 = vadd.f32 %v288, %v309
        %311 = vmatmul.f32.gmra.mxu0 %v266
        %v312 = vpop.f32.mrf.mxu0
        %v313 = vadd.f32 %v288, %v312
        %314 = vmatmul.f32.gmra.mxu0 %v267
        %v315 = vpop.f32.mrf.mxu0
        %v316 = vadd.f32 %v288, %v315
        %317 = vmatmul.f32.gmra.mxu0 %v268
        %v318 = vpop.f32.mrf.mxu0
        %v319 = vadd.f32 %v288, %v318
        %320 = vmatmul.f32.gmra.mxu0 %v269
        %v321 = vpop.f32.mrf.mxu0
        %v322 = vadd.f32 %v288, %v321
        %323 = vmatmul.f32.gmra.mxu0 %v270
        %v324 = vpop.f32.mrf.mxu0
        %v325 = vadd.f32 %v288, %v324
        %326 = vdwg.mxu0
        %v327 = vmax.f32 %v307, 0.0
        %v328 = vmax.f32 %v310, 0.0
        %v329 = vmax.f32 %v313, 0.0
        %v330 = vmax.f32 %v316, 0.0
        %v331 = vmax.f32 %v319, 0.0
        %v332 = vmax.f32 %v322, 0.0
        %v333 = vmax.f32 %v325, 0.0
        %s334 = scalar_lea.vmem [#allocation3], 128
        %v335 = vld [vmem:[%s334] sm:$0xff]
        %v336 = vld [vmem:[%s334 + $0x8] sm:$0xff]
        %v337 = vld [vmem:[%s334 + $0x10] sm:$0xff]
        %v338 = vld [vmem:[%s334 + $0x18] sm:$0xff]
        %v339 = vld [vmem:[%s334 + $0x20] sm:$0xff]
        %v340 = vld [vmem:[%s334 + $0x28] sm:$0xff]
        %v341 = vld [vmem:[%s334 + $0x30] sm:$0xff]
        %v342 = vld [vmem:[%s334 + $0x38] sm:$0xff]
        %v343 = vld [vmem:[%s334 + $0x40] sm:$0xff]
        %v344 = vld [vmem:[%s334 + $0x48] sm:$0xff]
        %v345 = vld [vmem:[%s334 + $0x50] sm:$0xff]
        %v346 = vld [vmem:[%s334 + $0x58] sm:$0xff]
        %v347 = vld [vmem:[%s334 + $0x60] sm:$0xff]
        %v348 = vld [vmem:[%s334 + $0x68] sm:$0xff]
        %v349 = vld [vmem:[%s334 + $0x70] sm:$0xff]
        %v350 = vld [vmem:[%s334 + $0x78] sm:$0xff]
        %v351 = vld [vmem:[%s3 + $0x1] sm:$0x1]
        %v352 = vperm.slane %v351, 0
        %353 = vmatpush.msra.mxu0 %v350
        %354 = vmatpush.msra.mxu0 %v349
        %355 = vmatpush.msra.mxu0 %v348
        %356 = vmatpush.msra.mxu0 %v347
        %357 = vmatpush.msra.mxu0 %v346
        %358 = vmatpush.msra.mxu0 %v345
        %359 = vmatpush.msra.mxu0 %v344
        %360 = vmatpush.msra.mxu0 %v343
        %361 = vmatpush.msra.mxu0 %v342
        %362 = vmatpush.msra.mxu0 %v341
        %363 = vmatpush.msra.mxu0 %v340
        %364 = vmatpush.msra.mxu0 %v339
        %365 = vmatpush.msra.mxu0 %v338
        %366 = vmatpush.msra.mxu0 %v337
        %367 = vmatpush.msra.mxu0 %v336
        %368 = vmatpush.msra.mxu0 %v335
        %369 = vmatmul.f32.gmra.mxu0 %v327
        %v370 = vpop.f32.mrf.mxu0
        %v371 = vadd.f32 %v352, %v370
        %372 = vmatmul.f32.gmra.mxu0 %v328
        %v373 = vpop.f32.mrf.mxu0
        %v374 = vadd.f32 %v352, %v373
        %375 = vmatmul.f32.gmra.mxu0 %v329
        %v376 = vpop.f32.mrf.mxu0
        %v377 = vadd.f32 %v352, %v376
        %378 = vmatmul.f32.gmra.mxu0 %v330
        %v379 = vpop.f32.mrf.mxu0
        %v380 = vadd.f32 %v352, %v379
        %381 = vmatmul.f32.gmra.mxu0 %v331
        %v382 = vpop.f32.mrf.mxu0
        %v383 = vadd.f32 %v352, %v382
        %384 = vmatmul.f32.gmra.mxu0 %v332
        %v385 = vpop.f32.mrf.mxu0
        %v386 = vadd.f32 %v352, %v385
        %387 = vmatmul.f32.gmra.mxu0 %v333
        %v388 = vpop.f32.mrf.mxu0
        %v389 = vadd.f32 %v352, %v388
        %390 = vdwg.mxu0
        %v391 = vmax.f32 %v371, 0.0
        %v392 = vmax.f32 %v374, 0.0
        %v393 = vmax.f32 %v377, 0.0
        %v394 = vmax.f32 %v380, 0.0
        %v395 = vmax.f32 %v383, 0.0
        %v396 = vmax.f32 %v386, 0.0
        %v397 = vmax.f32 %v389, 0.0
        %s398 = scalar_lea.vmem [#allocation3], 256
        %v399 = vld [vmem:[%s398] sm:$0xff]
        %v400 = vld [vmem:[%s398 + $0x8] sm:$0xff]
        %v401 = vld [vmem:[%s398 + $0x10] sm:$0xff]
        %v402 = vld [vmem:[%s398 + $0x18] sm:$0xff]
        %v403 = vld [vmem:[%s398 + $0x20] sm:$0xff]
        %v404 = vld [vmem:[%s398 + $0x28] sm:$0xff]
        %v405 = vld [vmem:[%s398 + $0x30] sm:$0xff]
        %v406 = vld [vmem:[%s398 + $0x38] sm:$0xff]
        %v407 = vld [vmem:[%s398 + $0x40] sm:$0xff]
        %v408 = vld [vmem:[%s398 + $0x48] sm:$0xff]
        %v409 = vld [vmem:[%s398 + $0x50] sm:$0xff]
        %v410 = vld [vmem:[%s398 + $0x58] sm:$0xff]
        %v411 = vld [vmem:[%s398 + $0x60] sm:$0xff]
        %v412 = vld [vmem:[%s398 + $0x68] sm:$0xff]
        %v413 = vld [vmem:[%s398 + $0x70] sm:$0xff]
        %v414 = vld [vmem:[%s398 + $0x78] sm:$0xff]
        %v415 = vld [vmem:[%s3 + $0x2] sm:$0x1]
        %v416 = vperm.slane %v415, 0
        %417 = vmatpush.msra.mxu0 %v414
        %418 = vmatpush.msra.mxu0 %v413
        %419 = vmatpush.msra.mxu0 %v412
        %420 = vmatpush.msra.mxu0 %v411
        %421 = vmatpush.msra.mxu0 %v410
        %422 = vmatpush.msra.mxu0 %v409
        %423 = vmatpush.msra.mxu0 %v408
        %424 = vmatpush.msra.mxu0 %v407
        %425 = vmatpush.msra.mxu0 %v406
        %426 = vmatpush.msra.mxu0 %v405
        %427 = vmatpush.msra.mxu0 %v404
        %428 = vmatpush.msra.mxu0 %v403
        %429 = vmatpush.msra.mxu0 %v402
        %430 = vmatpush.msra.mxu0 %v401
        %431 = vmatpush.msra.mxu0 %v400
        %432 = vmatpush.msra.mxu0 %v399
        %433 = vmatmul.f32.gmra.mxu0 %v391
        %v434 = vpop.f32.mrf.mxu0
        %v435 = vadd.f32 %v416, %v434
        %436 = vmatmul.f32.gmra.mxu0 %v392
        %v437 = vpop.f32.mrf.mxu0
        %v438 = vadd.f32 %v416, %v437
        %439 = vmatmul.f32.gmra.mxu0 %v393
        %v440 = vpop.f32.mrf.mxu0
        %v441 = vadd.f32 %v416, %v440
        %442 = vmatmul.f32.gmra.mxu0 %v394
        %v443 = vpop.f32.mrf.mxu0
        %v444 = vadd.f32 %v416, %v443
        %445 = vmatmul.f32.gmra.mxu0 %v395
        %v446 = vpop.f32.mrf.mxu0
        %v447 = vadd.f32 %v416, %v446
        %448 = vmatmul.f32.gmra.mxu0 %v396
        %v449 = vpop.f32.mrf.mxu0
        %v450 = vadd.f32 %v416, %v449
        %451 = vmatmul.f32.gmra.mxu0 %v397
        %v452 = vpop.f32.mrf.mxu0
        %v453 = vadd.f32 %v416, %v452
        %454 = vdwg.mxu0
        %v455 = vmax.f32 %v435, 0.0
        %v456 = vmax.f32 %v438, 0.0
        %v457 = vmax.f32 %v441, 0.0
        %v458 = vmax.f32 %v444, 0.0
        %v459 = vmax.f32 %v447, 0.0
        %v460 = vmax.f32 %v450, 0.0
        %v461 = vmax.f32 %v453, 0.0
        %s462 = scalar_lea.vmem [#allocation3], 384
        %v463 = vld [vmem:[%s462] sm:$0xff]
        %v464 = vld [vmem:[%s462 + $0x8] sm:$0xff]
        %v465 = vld [vmem:[%s462 + $0x10] sm:$0xff]
        %v466 = vld [vmem:[%s462 + $0x18] sm:$0xff]
        %v467 = vld [vmem:[%s462 + $0x20] sm:$0xff]
        %v468 = vld [vmem:[%s462 + $0x28] sm:$0xff]
        %v469 = vld [vmem:[%s462 + $0x30] sm:$0xff]
        %v470 = vld [vmem:[%s462 + $0x38] sm:$0xff]
        %v471 = vld [vmem:[%s462 + $0x40] sm:$0xff]
        %v472 = vld [vmem:[%s462 + $0x48] sm:$0xff]
        %v473 = vld [vmem:[%s462 + $0x50] sm:$0xff]
        %v474 = vld [vmem:[%s462 + $0x58] sm:$0xff]
        %v475 = vld [vmem:[%s462 + $0x60] sm:$0xff]
        %v476 = vld [vmem:[%s462 + $0x68] sm:$0xff]
        %v477 = vld [vmem:[%s462 + $0x70] sm:$0xff]
        %v478 = vld [vmem:[%s462 + $0x78] sm:$0xff]
        %v479 = vld [vmem:[%s3 + $0x3] sm:$0x1]
        %v480 = vperm.slane %v479, 0
        %481 = vmatpush.msra.mxu0 %v478
        %482 = vmatpush.msra.mxu0 %v477
        %483 = vmatpush.msra.mxu0 %v476
        %484 = vmatpush.msra.mxu0 %v475
        %485 = vmatpush.msra.mxu0 %v474
        %486 = vmatpush.msra.mxu0 %v473
        %487 = vmatpush.msra.mxu0 %v472
        %488 = vmatpush.msra.mxu0 %v471
        %489 = vmatpush.msra.mxu0 %v470
        %490 = vmatpush.msra.mxu0 %v469
        %491 = vmatpush.msra.mxu0 %v468
        %492 = vmatpush.msra.mxu0 %v467
        %493 = vmatpush.msra.mxu0 %v466
        %494 = vmatpush.msra.mxu0 %v465
        %495 = vmatpush.msra.mxu0 %v464
        %496 = vmatpush.msra.mxu0 %v463
        %497 = vmatmul.f32.gmra.mxu0 %v455
        %v498 = vpop.f32.mrf.mxu0
        %v499 = vadd.f32 %v480, %v498
        %500 = vmatmul.f32.gmra.mxu0 %v456
        %v501 = vpop.f32.mrf.mxu0
        %v502 = vadd.f32 %v480, %v501
        %503 = vmatmul.f32.gmra.mxu0 %v457
        %v504 = vpop.f32.mrf.mxu0
        %v505 = vadd.f32 %v480, %v504
        %506 = vmatmul.f32.gmra.mxu0 %v458
        %v507 = vpop.f32.mrf.mxu0
        %v508 = vadd.f32 %v480, %v507
        %509 = vmatmul.f32.gmra.mxu0 %v459
        %v510 = vpop.f32.mrf.mxu0
        %v511 = vadd.f32 %v480, %v510
        %512 = vmatmul.f32.gmra.mxu0 %v460
        %v513 = vpop.f32.mrf.mxu0
        %v514 = vadd.f32 %v480, %v513
        %515 = vmatmul.f32.gmra.mxu0 %v461
        %v516 = vpop.f32.mrf.mxu0
        %v517 = vadd.f32 %v480, %v516
        %518 = vdwg.mxu0
        %v519 = vmax.f32 %v499, 0.0
        %v520 = vmax.f32 %v502, 0.0
        %v521 = vmax.f32 %v505, 0.0
        %v522 = vmax.f32 %v508, 0.0
        %v523 = vmax.f32 %v511, 0.0
        %v524 = vmax.f32 %v514, 0.0
        %v525 = vmax.f32 %v517, 0.0
        %s526 = scalar_lea.vmem [#allocation3], 512
        %v527 = vld [vmem:[%s526] sm:$0xff]
        %v528 = vld [vmem:[%s526 + $0x8] sm:$0xff]
        %v529 = vld [vmem:[%s526 + $0x10] sm:$0xff]
        %v530 = vld [vmem:[%s526 + $0x18] sm:$0xff]
        %v531 = vld [vmem:[%s526 + $0x20] sm:$0xff]
        %v532 = vld [vmem:[%s526 + $0x28] sm:$0xff]
        %v533 = vld [vmem:[%s526 + $0x30] sm:$0xff]
        %v534 = vld [vmem:[%s526 + $0x38] sm:$0xff]
        %v535 = vld [vmem:[%s526 + $0x40] sm:$0xff]
        %v536 = vld [vmem:[%s526 + $0x48] sm:$0xff]
        %v537 = vld [vmem:[%s526 + $0x50] sm:$0xff]
        %v538 = vld [vmem:[%s526 + $0x58] sm:$0xff]
        %v539 = vld [vmem:[%s526 + $0x60] sm:$0xff]
        %v540 = vld [vmem:[%s526 + $0x68] sm:$0xff]
        %v541 = vld [vmem:[%s526 + $0x70] sm:$0xff]
        %v542 = vld [vmem:[%s526 + $0x78] sm:$0xff]
        %v543 = vld [vmem:[%s3 + $0x4] sm:$0x1]
        %v544 = vperm.slane %v543, 0
        %545 = vmatpush.msra.mxu0 %v542
        %546 = vmatpush.msra.mxu0 %v541
        %547 = vmatpush.msra.mxu0 %v540
        %548 = vmatpush.msra.mxu0 %v539
        %549 = vmatpush.msra.mxu0 %v538
        %550 = vmatpush.msra.mxu0 %v537
        %551 = vmatpush.msra.mxu0 %v536
        %552 = vmatpush.msra.mxu0 %v535
        %553 = vmatpush.msra.mxu0 %v534
        %554 = vmatpush.msra.mxu0 %v533
        %555 = vmatpush.msra.mxu0 %v532
        %556 = vmatpush.msra.mxu0 %v531
        %557 = vmatpush.msra.mxu0 %v530
        %558 = vmatpush.msra.mxu0 %v529
        %559 = vmatpush.msra.mxu0 %v528
        %560 = vmatpush.msra.mxu0 %v527
        %561 = vmatmul.f32.gmra.mxu0 %v519
        %v562 = vpop.f32.mrf.mxu0
        %v563 = vadd.f32 %v544, %v562
        %564 = vmatmul.f32.gmra.mxu0 %v520
        %v565 = vpop.f32.mrf.mxu0
        %v566 = vadd.f32 %v544, %v565
        %567 = vmatmul.f32.gmra.mxu0 %v521
        %v568 = vpop.f32.mrf.mxu0
        %v569 = vadd.f32 %v544, %v568
        %570 = vmatmul.f32.gmra.mxu0 %v522
        %v571 = vpop.f32.mrf.mxu0
        %v572 = vadd.f32 %v544, %v571
        %573 = vmatmul.f32.gmra.mxu0 %v523
        %v574 = vpop.f32.mrf.mxu0
        %v575 = vadd.f32 %v544, %v574
        %576 = vmatmul.f32.gmra.mxu0 %v524
        %v577 = vpop.f32.mrf.mxu0
        %v578 = vadd.f32 %v544, %v577
        %579 = vmatmul.f32.gmra.mxu0 %v525
        %v580 = vpop.f32.mrf.mxu0
        %v581 = vadd.f32 %v544, %v580
        %582 = vdwg.mxu0
        %v583 = vld [vmem:[%s232] sm:$0xff]
        %v584 = vld [vmem:[%s232 + $0x8] sm:$0xff]
        %v585 = vld [vmem:[%s232 + $0x10] sm:$0xff]
        %v586 = vld [vmem:[%s232 + $0x18] sm:$0xff]
        %v587 = vld [vmem:[%s232 + $0x20] sm:$0xff]
        %v588 = vld [vmem:[%s232 + $0x28] sm:$0xff]
        %v589 = vld [vmem:[%s232 + $0x30] sm:$0xff]
        %vm590 = vcmask 15360
        %591 = vst.msk [vmem:[#allocation2] sm:$0xff] %vm590, %v583
        %592 = vst.msk [vmem:[#allocation2 + $0x8] sm:$0xff] %vm590, %v584
        %593 = vst.msk [vmem:[#allocation2 + $0x10] sm:$0xff] %vm590, %v585
        %594 = vst.msk [vmem:[#allocation2 + $0x18] sm:$0xff] %vm590, %v586
        %595 = vst.msk [vmem:[#allocation2 + $0x20] sm:$0xff] %vm590, %v587
        %596 = vst.msk [vmem:[#allocation2 + $0x28] sm:$0xff] %vm590, %v588
        %597 = vst.msk [vmem:[#allocation2 + $0x30] sm:$0xff] %vm590, %v589
        %vm598 = vcmp.lt.s32.totalorder %v241, 2
        %v599 = vld [vmem:[#allocation2] sm:$0xff]
        %v600 = vld [vmem:[#allocation2 + $0x8] sm:$0xff]
        %v601 = vld [vmem:[#allocation2 + $0x10] sm:$0xff]
        %v602 = vld [vmem:[#allocation2 + $0x18] sm:$0xff]
        %v603 = vld [vmem:[#allocation2 + $0x20] sm:$0xff]
        %v604 = vld [vmem:[#allocation2 + $0x28] sm:$0xff]
        %v605 = vld [vmem:[#allocation2 + $0x30] sm:$0xff]
        %v606 = vsel %vm598, %v599, 0.0
        %v607 = vsel %vm598, %v600, 0.0
        %v608 = vsel %vm598, %v601, 0.0
        %v609 = vsel %vm598, %v602, 0.0
        %v610 = vsel %vm598, %v603, 0.0
        %v611 = vsel %vm598, %v604, 0.0
        %v612 = vsel %vm598, %v605, 0.0
        %v613 = vmul.f32 %v563, 0.5
        %v614 = vmul.f32 %v566, 0.5
        %v615 = vmul.f32 %v569, 0.5
        %v616 = vmul.f32 %v572, 0.5
        %v617 = vmul.f32 %v575, 0.5
        %v618 = vmul.f32 %v578, 0.5
        %v619 = vmul.f32 %v581, 0.5
        %v620 = vmul.f32 %v613, 1.442695
        %v621 = vpow.pop %v620
        %v622 = vmul.f32 %v614, 1.442695
        %v623 = vpow.pop %v622
        %v624 = vmul.f32 %v615, 1.442695
        %v625 = vpow.pop %v624
        %v626 = vmul.f32 %v616, 1.442695
        %v627 = vpow.pop %v626
        %v628 = vmul.f32 %v617, 1.442695
        %v629 = vpow.pop %v628
        %v630 = vmul.f32 %v618, 1.442695
        %v631 = vpow.pop %v630
        %v632 = vmul.f32 %v619, 1.442695
        %v633 = vpow.pop %v632
        %v634 = vmul.f32 %v606, %v621
        %v635 = vmul.f32 %v607, %v623
        %v636 = vmul.f32 %v608, %v625
        %v637 = vmul.f32 %v609, %v627
        %v638 = vmul.f32 %v610, %v629
        %v639 = vmul.f32 %v611, %v631
        %v640 = vmul.f32 %v612, %v633
        %v641 = vsel %vm598, %v634, %v563
        %v642 = vsel %vm598, %v635, %v566
        %v643 = vsel %vm598, %v636, %v569
        %v644 = vsel %vm598, %v637, %v572
        %v645 = vsel %vm598, %v638, %v575
        %v646 = vsel %vm598, %v639, %v578
        %v647 = vsel %vm598, %v640, %v581
        %s648 = scalar_lea.vmem [#allocation3], 640
        %v649 = vld [vmem:[%s648] sm:$0xff]
        %v650 = vld [vmem:[%s648 + $0x8] sm:$0xff]
        %v651 = vld [vmem:[%s648 + $0x10] sm:$0xff]
        %v652 = vld [vmem:[%s648 + $0x18] sm:$0xff]
        %v653 = vld [vmem:[%s648 + $0x20] sm:$0xff]
        %v654 = vld [vmem:[%s648 + $0x28] sm:$0xff]
        %v655 = vld [vmem:[%s648 + $0x30] sm:$0xff]
        %v656 = vld [vmem:[%s648 + $0x38] sm:$0xff]
        %v657 = vld [vmem:[%s648 + $0x40] sm:$0xff]
        %v658 = vld [vmem:[%s648 + $0x48] sm:$0xff]
        %v659 = vld [vmem:[%s648 + $0x50] sm:$0xff]
        %v660 = vld [vmem:[%s648 + $0x58] sm:$0xff]
        %v661 = vld [vmem:[%s648 + $0x60] sm:$0xff]
        %v662 = vld [vmem:[%s648 + $0x68] sm:$0xff]
        %v663 = vld [vmem:[%s648 + $0x70] sm:$0xff]
        %v664 = vld [vmem:[%s648 + $0x78] sm:$0xff]
        %v665 = vld [vmem:[%s3 + $0x5] sm:$0x1]
        %v666 = vperm.slane %v665, 0
        %667 = vmatpush.msra.mxu0 %v664
        %668 = vmatpush.msra.mxu0 %v663
        %669 = vmatpush.msra.mxu0 %v662
        %670 = vmatpush.msra.mxu0 %v661
        %671 = vmatpush.msra.mxu0 %v660
        %672 = vmatpush.msra.mxu0 %v659
        %673 = vmatpush.msra.mxu0 %v658
        %674 = vmatpush.msra.mxu0 %v657
        %675 = vmatpush.msra.mxu0 %v656
        %676 = vmatpush.msra.mxu0 %v655
        %677 = vmatpush.msra.mxu0 %v654
        %678 = vmatpush.msra.mxu0 %v653
        %679 = vmatpush.msra.mxu0 %v652
        %680 = vmatpush.msra.mxu0 %v651
        %681 = vmatpush.msra.mxu0 %v650
        %682 = vmatpush.msra.mxu0 %v649
        %683 = vmatmul.f32.gmra.mxu0 %v641
        %v684 = vpop.f32.mrf.mxu0
        %v685 = vadd.f32 %v666, %v684
        %686 = vmatmul.f32.gmra.mxu0 %v642
        %v687 = vpop.f32.mrf.mxu0
        %v688 = vadd.f32 %v666, %v687
        %689 = vmatmul.f32.gmra.mxu0 %v643
        %v690 = vpop.f32.mrf.mxu0
        %v691 = vadd.f32 %v666, %v690
        %692 = vmatmul.f32.gmra.mxu0 %v644
        %v693 = vpop.f32.mrf.mxu0
        %v694 = vadd.f32 %v666, %v693
        %695 = vmatmul.f32.gmra.mxu0 %v645
        %v696 = vpop.f32.mrf.mxu0
        %v697 = vadd.f32 %v666, %v696
        %698 = vmatmul.f32.gmra.mxu0 %v646
        %v699 = vpop.f32.mrf.mxu0
        %v700 = vadd.f32 %v666, %v699
        %701 = vmatmul.f32.gmra.mxu0 %v647
        %v702 = vpop.f32.mrf.mxu0
        %v703 = vadd.f32 %v666, %v702
        %704 = vdwg.mxu0
        %v705 = vmax.f32 %v685, 0.0
        %v706 = vmax.f32 %v688, 0.0
        %v707 = vmax.f32 %v691, 0.0
        %v708 = vmax.f32 %v694, 0.0
        %v709 = vmax.f32 %v697, 0.0
        %v710 = vmax.f32 %v700, 0.0
        %v711 = vmax.f32 %v703, 0.0
        %s712 = scalar_lea.vmem [#allocation3], 768
        %v713 = vld [vmem:[%s712] sm:$0xff]
        %v714 = vld [vmem:[%s712 + $0x8] sm:$0xff]
        %v715 = vld [vmem:[%s712 + $0x10] sm:$0xff]
        %v716 = vld [vmem:[%s712 + $0x18] sm:$0xff]
        %v717 = vld [vmem:[%s712 + $0x20] sm:$0xff]
        %v718 = vld [vmem:[%s712 + $0x28] sm:$0xff]
        %v719 = vld [vmem:[%s712 + $0x30] sm:$0xff]
        %v720 = vld [vmem:[%s712 + $0x38] sm:$0xff]
        %v721 = vld [vmem:[%s712 + $0x40] sm:$0xff]
        %v722 = vld [vmem:[%s712 + $0x48] sm:$0xff]
        %v723 = vld [vmem:[%s712 + $0x50] sm:$0xff]
        %v724 = vld [vmem:[%s712 + $0x58] sm:$0xff]
        %v725 = vld [vmem:[%s712 + $0x60] sm:$0xff]
        %v726 = vld [vmem:[%s712 + $0x68] sm:$0xff]
        %v727 = vld [vmem:[%s712 + $0x70] sm:$0xff]
        %v728 = vld [vmem:[%s712 + $0x78] sm:$0xff]
        %v729 = vld [vmem:[%s3 + $0x6] sm:$0x1]
        %v730 = vperm.slane %v729, 0
        %731 = vmatpush.msra.mxu0 %v728
        %732 = vmatpush.msra.mxu0 %v727
        %733 = vmatpush.msra.mxu0 %v726
        %734 = vmatpush.msra.mxu0 %v725
        %735 = vmatpush.msra.mxu0 %v724
        %736 = vmatpush.msra.mxu0 %v723
        %737 = vmatpush.msra.mxu0 %v722
        %738 = vmatpush.msra.mxu0 %v721
        %739 = vmatpush.msra.mxu0 %v720
        %740 = vmatpush.msra.mxu0 %v719
        %741 = vmatpush.msra.mxu0 %v718
        %742 = vmatpush.msra.mxu0 %v717
        %743 = vmatpush.msra.mxu0 %v716
        %744 = vmatpush.msra.mxu0 %v715
        %745 = vmatpush.msra.mxu0 %v714
        %746 = vmatpush.msra.mxu0 %v713
        %747 = vmatmul.f32.gmra.mxu0 %v705
        %v748 = vpop.f32.mrf.mxu0
        %v749 = vadd.f32 %v730, %v748
        %750 = vmatmul.f32.gmra.mxu0 %v706
        %v751 = vpop.f32.mrf.mxu0
        %v752 = vadd.f32 %v730, %v751
        %753 = vmatmul.f32.gmra.mxu0 %v707
        %v754 = vpop.f32.mrf.mxu0
        %v755 = vadd.f32 %v730, %v754
        %756 = vmatmul.f32.gmra.mxu0 %v708
        %v757 = vpop.f32.mrf.mxu0
        %v758 = vadd.f32 %v730, %v757
        %759 = vmatmul.f32.gmra.mxu0 %v709
        %v760 = vpop.f32.mrf.mxu0
        %v761 = vadd.f32 %v730, %v760
        %762 = vmatmul.f32.gmra.mxu0 %v710
        %v763 = vpop.f32.mrf.mxu0
        %v764 = vadd.f32 %v730, %v763
        %765 = vmatmul.f32.gmra.mxu0 %v711
        %v766 = vpop.f32.mrf.mxu0
        %v767 = vadd.f32 %v730, %v766
        %768 = vdwg.mxu0
        %v769 = vmax.f32 %v749, 0.0
        %v770 = vmax.f32 %v752, 0.0
        %v771 = vmax.f32 %v755, 0.0
        %v772 = vmax.f32 %v758, 0.0
        %v773 = vmax.f32 %v761, 0.0
        %v774 = vmax.f32 %v764, 0.0
        %v775 = vmax.f32 %v767, 0.0
        %s776 = scalar_lea.vmem [#allocation3], 896
        %v777 = vld [vmem:[%s776] sm:$0xff]
        %v778 = vld [vmem:[%s776 + $0x8] sm:$0xff]
        %v779 = vld [vmem:[%s776 + $0x10] sm:$0xff]
        %v780 = vld [vmem:[%s776 + $0x18] sm:$0xff]
        %v781 = vld [vmem:[%s776 + $0x20] sm:$0xff]
        %v782 = vld [vmem:[%s776 + $0x28] sm:$0xff]
        %v783 = vld [vmem:[%s776 + $0x30] sm:$0xff]
        %v784 = vld [vmem:[%s776 + $0x38] sm:$0xff]
        %v785 = vld [vmem:[%s776 + $0x40] sm:$0xff]
        %v786 = vld [vmem:[%s776 + $0x48] sm:$0xff]
        %v787 = vld [vmem:[%s776 + $0x50] sm:$0xff]
        %v788 = vld [vmem:[%s776 + $0x58] sm:$0xff]
        %v789 = vld [vmem:[%s776 + $0x60] sm:$0xff]
        %v790 = vld [vmem:[%s776 + $0x68] sm:$0xff]
        %v791 = vld [vmem:[%s776 + $0x70] sm:$0xff]
        %v792 = vld [vmem:[%s776 + $0x78] sm:$0xff]
        %v793 = vld [vmem:[%s3 + $0x7] sm:$0x1]
        %v794 = vperm.slane %v793, 0
        %795 = vmatpush.msra.mxu0 %v792
        %796 = vmatpush.msra.mxu0 %v791
        %797 = vmatpush.msra.mxu0 %v790
        %798 = vmatpush.msra.mxu0 %v789
        %799 = vmatpush.msra.mxu0 %v788
        %800 = vmatpush.msra.mxu0 %v787
        %801 = vmatpush.msra.mxu0 %v786
        %802 = vmatpush.msra.mxu0 %v785
        %803 = vmatpush.msra.mxu0 %v784
        %804 = vmatpush.msra.mxu0 %v783
        %805 = vmatpush.msra.mxu0 %v782
        %806 = vmatpush.msra.mxu0 %v781
        %807 = vmatpush.msra.mxu0 %v780
        %808 = vmatpush.msra.mxu0 %v779
        %809 = vmatpush.msra.mxu0 %v778
        %810 = vmatpush.msra.mxu0 %v777
        %811 = vmatmul.f32.gmra.mxu0 %v769
        %v812 = vpop.f32.mrf.mxu0
        %v813 = vadd.f32 %v794, %v812
        %814 = vmatmul.f32.gmra.mxu0 %v770
        %v815 = vpop.f32.mrf.mxu0
        %v816 = vadd.f32 %v794, %v815
        %817 = vmatmul.f32.gmra.mxu0 %v771
        %v818 = vpop.f32.mrf.mxu0
        %v819 = vadd.f32 %v794, %v818
        %820 = vmatmul.f32.gmra.mxu0 %v772
        %v821 = vpop.f32.mrf.mxu0
        %v822 = vadd.f32 %v794, %v821
        %823 = vmatmul.f32.gmra.mxu0 %v773
        %v824 = vpop.f32.mrf.mxu0
        %v825 = vadd.f32 %v794, %v824
        %826 = vmatmul.f32.gmra.mxu0 %v774
        %v827 = vpop.f32.mrf.mxu0
        %v828 = vadd.f32 %v794, %v827
        %829 = vmatmul.f32.gmra.mxu0 %v775
        %v830 = vpop.f32.mrf.mxu0
        %v831 = vadd.f32 %v794, %v830
        %832 = vdwg.mxu0
        %v833 = vmax.f32 %v813, 0.0
        %v834 = vmax.f32 %v816, 0.0
        %v835 = vmax.f32 %v819, 0.0
        %v836 = vmax.f32 %v822, 0.0
        %v837 = vmax.f32 %v825, 0.0
        %v838 = vmax.f32 %v828, 0.0
        %v839 = vmax.f32 %v831, 0.0
        %s840 = scalar_lea.vmem [#allocation3], 1024
        %v841 = vld [vmem:[%s840] sm:$0xff]
        %v842 = vld [vmem:[%s840 + $0x8] sm:$0xff]
        %v843 = vld [vmem:[%s840 + $0x10] sm:$0xff]
        %v844 = vld [vmem:[%s840 + $0x18] sm:$0xff]
        %v845 = vld [vmem:[%s840 + $0x20] sm:$0xff]
        %v846 = vld [vmem:[%s840 + $0x28] sm:$0xff]
        %v847 = vld [vmem:[%s840 + $0x30] sm:$0xff]
        %v848 = vld [vmem:[%s840 + $0x38] sm:$0xff]
        %v849 = vld [vmem:[%s840 + $0x40] sm:$0xff]
        %v850 = vld [vmem:[%s840 + $0x48] sm:$0xff]
        %v851 = vld [vmem:[%s840 + $0x50] sm:$0xff]
        %v852 = vld [vmem:[%s840 + $0x58] sm:$0xff]
        %v853 = vld [vmem:[%s840 + $0x60] sm:$0xff]
        %v854 = vld [vmem:[%s840 + $0x68] sm:$0xff]
        %v855 = vld [vmem:[%s840 + $0x70] sm:$0xff]
        %v856 = vld [vmem:[%s840 + $0x78] sm:$0xff]
        %v857 = vld [vmem:[%s3 + $0x8] sm:$0x1]
        %v858 = vperm.slane %v857, 0
        %859 = vmatpush.msra.mxu0 %v856
        %860 = vmatpush.msra.mxu0 %v855
        %861 = vmatpush.msra.mxu0 %v854
        %862 = vmatpush.msra.mxu0 %v853
        %863 = vmatpush.msra.mxu0 %v852
        %864 = vmatpush.msra.mxu0 %v851
        %865 = vmatpush.msra.mxu0 %v850
        %866 = vmatpush.msra.mxu0 %v849
        %867 = vmatpush.msra.mxu0 %v848
        %868 = vmatpush.msra.mxu0 %v847
        %869 = vmatpush.msra.mxu0 %v846
        %870 = vmatpush.msra.mxu0 %v845
        %871 = vmatpush.msra.mxu0 %v844
        %872 = vmatpush.msra.mxu0 %v843
        %873 = vmatpush.msra.mxu0 %v842
        %874 = vmatpush.msra.mxu0 %v841
        %875 = vmatmul.f32.gmra.mxu0 %v833
        %v876 = vpop.f32.mrf.mxu0
        %v877 = vadd.f32 %v858, %v876
        %878 = vmatmul.f32.gmra.mxu0 %v834
        %v879 = vpop.f32.mrf.mxu0
        %v880 = vadd.f32 %v858, %v879
        %881 = vmatmul.f32.gmra.mxu0 %v835
        %v882 = vpop.f32.mrf.mxu0
        %v883 = vadd.f32 %v858, %v882
        %884 = vmatmul.f32.gmra.mxu0 %v836
        %v885 = vpop.f32.mrf.mxu0
        %v886 = vadd.f32 %v858, %v885
        %887 = vmatmul.f32.gmra.mxu0 %v837
        %v888 = vpop.f32.mrf.mxu0
        %v889 = vadd.f32 %v858, %v888
        %890 = vmatmul.f32.gmra.mxu0 %v838
        %v891 = vpop.f32.mrf.mxu0
        %v892 = vadd.f32 %v858, %v891
        %893 = vmatmul.f32.gmra.mxu0 %v839
        %v894 = vpop.f32.mrf.mxu0
        %v895 = vadd.f32 %v858, %v894
        %896 = vdwg.mxu0
        %v897 = vxor.u32 %v877, 2147483648
        %v898 = vxor.u32 %v880, 2147483648
        %v899 = vxor.u32 %v883, 2147483648
        %v900 = vxor.u32 %v886, 2147483648
        %v901 = vxor.u32 %v889, 2147483648
        %v902 = vxor.u32 %v892, 2147483648
        %v903 = vxor.u32 %v895, 2147483648
        %v904 = vmul.f32 %v897, 1.442695
        %v905 = vpow.pop %v904
        %v906 = vmul.f32 %v898, 1.442695
        %v907 = vpow.pop %v906
        %v908 = vmul.f32 %v899, 1.442695
        %v909 = vpow.pop %v908
        %v910 = vmul.f32 %v900, 1.442695
        %v911 = vpow.pop %v910
        %v912 = vmul.f32 %v901, 1.442695
        %v913 = vpow.pop %v912
        %v914 = vmul.f32 %v902, 1.442695
        %v915 = vpow.pop %v914
        %v916 = vmul.f32 %v903, 1.442695
        %v917 = vpow.pop %v916
        %v918 = vadd.f32 %v905, 1.0
        %v919 = vadd.f32 %v907, 1.0
        %v920 = vadd.f32 %v909, 1.0
        %v921 = vadd.f32 %v911, 1.0
        %v922 = vadd.f32 %v913, 1.0
        %v923 = vadd.f32 %v915, 1.0
        %v924 = vadd.f32 %v917, 1.0
        %v925 = vrcp.pop %v918
        %v926 = vmul.f32 %v918, %v925
        %v927 = vsub.f32 1.0, %v926
        %v928 = vmul.f32 %v925, %v927
        %v929 = vadd.f32 %v925, %v928
        %vm930 = vweird.f32 %v918
        %vm931 = vweird.f32 %v925
        %vm932 = vmor %vm930, %vm931
        %v933 = vsel %vm932, %v925, %v929
        %v934 = vand.u32 2147483647, %v918
        %vm935 = vcmp.eq.f32.partialorder %v934, 8.507059e+37
        %v936 = vand.u32 %v918, 2147483648
        %v937 = vor.u32 1.1754944e-38, %v936
        %v938 = vsel %vm935, %v937, %v933
        %v939 = vmul.f32 1.0, %v938
        %v940 = vrcp.pop %v919
        %v941 = vmul.f32 %v919, %v940
        %v942 = vsub.f32 1.0, %v941
        %v943 = vmul.f32 %v940, %v942
        %v944 = vadd.f32 %v940, %v943
        %vm945 = vweird.f32 %v919
        %vm946 = vweird.f32 %v940
        %vm947 = vmor %vm945, %vm946
        %v948 = vsel %vm947, %v940, %v944
        %v949 = vand.u32 2147483647, %v919
        %vm950 = vcmp.eq.f32.partialorder %v949, 8.507059e+37
        %v951 = vand.u32 %v919, 2147483648
        %v952 = vor.u32 1.1754944e-38, %v951
        %v953 = vsel %vm950, %v952, %v948
        %v954 = vmul.f32 1.0, %v953
        %v955 = vrcp.pop %v920
        %v956 = vmul.f32 %v920, %v955
        %v957 = vsub.f32 1.0, %v956
        %v958 = vmul.f32 %v955, %v957
        %v959 = vadd.f32 %v955, %v958
        %vm960 = vweird.f32 %v920
        %vm961 = vweird.f32 %v955
        %vm962 = vmor %vm960, %vm961
        %v963 = vsel %vm962, %v955, %v959
        %v964 = vand.u32 2147483647, %v920
        %vm965 = vcmp.eq.f32.partialorder %v964, 8.507059e+37
        %v966 = vand.u32 %v920, 2147483648
        %v967 = vor.u32 1.1754944e-38, %v966
        %v968 = vsel %vm965, %v967, %v963
        %v969 = vmul.f32 1.0, %v968
        %v970 = vrcp.pop %v921
        %v971 = vmul.f32 %v921, %v970
        %v972 = vsub.f32 1.0, %v971
        %v973 = vmul.f32 %v970, %v972
        %v974 = vadd.f32 %v970, %v973
        %vm975 = vweird.f32 %v921
        %vm976 = vweird.f32 %v970
        %vm977 = vmor %vm975, %vm976
        %v978 = vsel %vm977, %v970, %v974
        %v979 = vand.u32 2147483647, %v921
        %vm980 = vcmp.eq.f32.partialorder %v979, 8.507059e+37
        %v981 = vand.u32 %v921, 2147483648
        %v982 = vor.u32 1.1754944e-38, %v981
        %v983 = vsel %vm980, %v982, %v978
        %v984 = vmul.f32 1.0, %v983
        %v985 = vrcp.pop %v922
        %v986 = vmul.f32 %v922, %v985
        %v987 = vsub.f32 1.0, %v986
        %v988 = vmul.f32 %v985, %v987
        %v989 = vadd.f32 %v985, %v988
        %vm990 = vweird.f32 %v922
        %vm991 = vweird.f32 %v985
        %vm992 = vmor %vm990, %vm991
        %v993 = vsel %vm992, %v985, %v989
        %v994 = vand.u32 2147483647, %v922
        %vm995 = vcmp.eq.f32.partialorder %v994, 8.507059e+37
        %v996 = vand.u32 %v922, 2147483648
        %v997 = vor.u32 1.1754944e-38, %v996
        %v998 = vsel %vm995, %v997, %v993
        %v999 = vmul.f32 1.0, %v998
        %v1000 = vrcp.pop %v923
        %v1001 = vmul.f32 %v923, %v1000
        %v1002 = vsub.f32 1.0, %v1001
        %v1003 = vmul.f32 %v1000, %v1002
        %v1004 = vadd.f32 %v1000, %v1003
        %vm1005 = vweird.f32 %v923
        %vm1006 = vweird.f32 %v1000
        %vm1007 = vmor %vm1005, %vm1006
        %v1008 = vsel %vm1007, %v1000, %v1004
        %v1009 = vand.u32 2147483647, %v923
        %vm1010 = vcmp.eq.f32.partialorder %v1009, 8.507059e+37
        %v1011 = vand.u32 %v923, 2147483648
        %v1012 = vor.u32 1.1754944e-38, %v1011
        %v1013 = vsel %vm1010, %v1012, %v1008
        %v1014 = vmul.f32 1.0, %v1013
        %v1015 = vrcp.pop %v924
        %v1016 = vmul.f32 %v924, %v1015
        %v1017 = vsub.f32 1.0, %v1016
        %v1018 = vmul.f32 %v1015, %v1017
        %v1019 = vadd.f32 %v1015, %v1018
        %vm1020 = vweird.f32 %v924
        %vm1021 = vweird.f32 %v1015
        %vm1022 = vmor %vm1020, %vm1021
        %v1023 = vsel %vm1022, %v1015, %v1019
        %v1024 = vand.u32 2147483647, %v924
        %vm1025 = vcmp.eq.f32.partialorder %v1024, 8.507059e+37
        %v1026 = vand.u32 %v924, 2147483648
        %v1027 = vor.u32 1.1754944e-38, %v1026
        %v1028 = vsel %vm1025, %v1027, %v1023
        %v1029 = vmul.f32 1.0, %v1028
        %s1030 = scalar_lea.vmem [#allocation3], 1152
        %v1031 = vld [vmem:[%s1030] sm:$0xff]
        %v1032 = vld [vmem:[%s1030 + $0x8] sm:$0xff]
        %v1033 = vld [vmem:[%s1030 + $0x10] sm:$0xff]
        %v1034 = vld [vmem:[%s1030 + $0x18] sm:$0xff]
        %v1035 = vld [vmem:[%s1030 + $0x20] sm:$0xff]
        %v1036 = vld [vmem:[%s1030 + $0x28] sm:$0xff]
        %v1037 = vld [vmem:[%s1030 + $0x30] sm:$0xff]
        %v1038 = vld [vmem:[%s1030 + $0x38] sm:$0xff]
        %v1039 = vld [vmem:[%s1030 + $0x40] sm:$0xff]
        %v1040 = vld [vmem:[%s1030 + $0x48] sm:$0xff]
        %v1041 = vld [vmem:[%s1030 + $0x50] sm:$0xff]
        %v1042 = vld [vmem:[%s1030 + $0x58] sm:$0xff]
        %v1043 = vld [vmem:[%s1030 + $0x60] sm:$0xff]
        %v1044 = vld [vmem:[%s1030 + $0x68] sm:$0xff]
        %v1045 = vld [vmem:[%s1030 + $0x70] sm:$0xff]
        %v1046 = vld [vmem:[%s1030 + $0x78] sm:$0xff]
        %v1047 = vld [vmem:[%s3 + $0x9] sm:$0x1]
        %v1048 = vperm.slane %v1047, 0
        %1049 = vmatpush.msra.mxu0 %v1046
        %1050 = vmatpush.msra.mxu0 %v1045
        %1051 = vmatpush.msra.mxu0 %v1044
        %1052 = vmatpush.msra.mxu0 %v1043
        %1053 = vmatpush.msra.mxu0 %v1042
        %1054 = vmatpush.msra.mxu0 %v1041
        %1055 = vmatpush.msra.mxu0 %v1040
        %1056 = vmatpush.msra.mxu0 %v1039
        %1057 = vmatpush.msra.mxu0 %v1038
        %1058 = vmatpush.msra.mxu0 %v1037
        %1059 = vmatpush.msra.mxu0 %v1036
        %1060 = vmatpush.msra.mxu0 %v1035
        %1061 = vmatpush.msra.mxu0 %v1034
        %1062 = vmatpush.msra.mxu0 %v1033
        %1063 = vmatpush.msra.mxu0 %v1032
        %1064 = vmatpush.msra.mxu0 %v1031
        %1065 = vmatmul.f32.gmra.mxu0 %v563
        %v1066 = vpop.f32.mrf.mxu0
        %v1067 = vadd.f32 %v1048, %v1066
        %1068 = vmatmul.f32.gmra.mxu0 %v566
        %v1069 = vpop.f32.mrf.mxu0
        %v1070 = vadd.f32 %v1048, %v1069
        %1071 = vmatmul.f32.gmra.mxu0 %v569
        %v1072 = vpop.f32.mrf.mxu0
        %v1073 = vadd.f32 %v1048, %v1072
        %1074 = vmatmul.f32.gmra.mxu0 %v572
        %v1075 = vpop.f32.mrf.mxu0
        %v1076 = vadd.f32 %v1048, %v1075
        %1077 = vmatmul.f32.gmra.mxu0 %v575
        %v1078 = vpop.f32.mrf.mxu0
        %v1079 = vadd.f32 %v1048, %v1078
        %1080 = vmatmul.f32.gmra.mxu0 %v578
        %v1081 = vpop.f32.mrf.mxu0
        %v1082 = vadd.f32 %v1048, %v1081
        %1083 = vmatmul.f32.gmra.mxu0 %v581
        %v1084 = vpop.f32.mrf.mxu0
        %v1085 = vadd.f32 %v1048, %v1084
        %1086 = vdwg.mxu0
        %v1087 = vmax.f32 %v1067, 0.0
        %v1088 = vmax.f32 %v1070, 0.0
        %v1089 = vmax.f32 %v1073, 0.0
        %v1090 = vmax.f32 %v1076, 0.0
        %v1091 = vmax.f32 %v1079, 0.0
        %v1092 = vmax.f32 %v1082, 0.0
        %v1093 = vmax.f32 %v1085, 0.0
        %s1094 = scalar_lea.vmem [#allocation3], 1280
        %v1095 = vld [vmem:[%s1094] sm:$0xff]
        %v1096 = vld [vmem:[%s1094 + $0x8] sm:$0xff]
        %v1097 = vld [vmem:[%s1094 + $0x10] sm:$0xff]
        %v1098 = vld [vmem:[%s1094 + $0x18] sm:$0xff]
        %v1099 = vld [vmem:[%s1094 + $0x20] sm:$0xff]
        %v1100 = vld [vmem:[%s1094 + $0x28] sm:$0xff]
        %v1101 = vld [vmem:[%s1094 + $0x30] sm:$0xff]
        %v1102 = vld [vmem:[%s1094 + $0x38] sm:$0xff]
        %v1103 = vld [vmem:[%s1094 + $0x40] sm:$0xff]
        %v1104 = vld [vmem:[%s1094 + $0x48] sm:$0xff]
        %v1105 = vld [vmem:[%s1094 + $0x50] sm:$0xff]
        %v1106 = vld [vmem:[%s1094 + $0x58] sm:$0xff]
        %v1107 = vld [vmem:[%s1094 + $0x60] sm:$0xff]
        %v1108 = vld [vmem:[%s1094 + $0x68] sm:$0xff]
        %v1109 = vld [vmem:[%s1094 + $0x70] sm:$0xff]
        %v1110 = vld [vmem:[%s1094 + $0x78] sm:$0xff]
        %v1111 = vld [vmem:[%s3 + $0xa] sm:$0x1]
        %v1112 = vperm.slane %v1111, 0
        %1113 = vmatpush.msra.mxu0 %v1110
        %1114 = vmatpush.msra.mxu0 %v1109
        %1115 = vmatpush.msra.mxu0 %v1108
        %1116 = vmatpush.msra.mxu0 %v1107
        %1117 = vmatpush.msra.mxu0 %v1106
        %1118 = vmatpush.msra.mxu0 %v1105
        %1119 = vmatpush.msra.mxu0 %v1104
        %1120 = vmatpush.msra.mxu0 %v1103
        %1121 = vmatpush.msra.mxu0 %v1102
        %1122 = vmatpush.msra.mxu0 %v1101
        %1123 = vmatpush.msra.mxu0 %v1100
        %1124 = vmatpush.msra.mxu0 %v1099
        %1125 = vmatpush.msra.mxu0 %v1098
        %1126 = vmatpush.msra.mxu0 %v1097
        %1127 = vmatpush.msra.mxu0 %v1096
        %1128 = vmatpush.msra.mxu0 %v1095
        %1129 = vmatmul.f32.gmra.mxu0 %v1087
        %v1130 = vpop.f32.mrf.mxu0
        %v1131 = vadd.f32 %v1112, %v1130
        %1132 = vmatmul.f32.gmra.mxu0 %v1088
        %v1133 = vpop.f32.mrf.mxu0
        %v1134 = vadd.f32 %v1112, %v1133
        %1135 = vmatmul.f32.gmra.mxu0 %v1089
        %v1136 = vpop.f32.mrf.mxu0
        %v1137 = vadd.f32 %v1112, %v1136
        %1138 = vmatmul.f32.gmra.mxu0 %v1090
        %v1139 = vpop.f32.mrf.mxu0
        %v1140 = vadd.f32 %v1112, %v1139
        %1141 = vmatmul.f32.gmra.mxu0 %v1091
        %v1142 = vpop.f32.mrf.mxu0
        %v1143 = vadd.f32 %v1112, %v1142
        %1144 = vmatmul.f32.gmra.mxu0 %v1092
        %v1145 = vpop.f32.mrf.mxu0
        %v1146 = vadd.f32 %v1112, %v1145
        %1147 = vmatmul.f32.gmra.mxu0 %v1093
        %v1148 = vpop.f32.mrf.mxu0
        %v1149 = vadd.f32 %v1112, %v1148
        %1150 = vdwg.mxu0
        %vm1151 = vcmp.ge.s32.totalorder %v241, 4
        %vm1152 = vcmp.lt.s32.totalorder %v241, 19
        %vm1153 = vmand %vm1151, %vm1152
        %v1154 = vsel %vm1153, %v939, 0.0
        %v1155 = vsel %vm1153, %v954, 0.0
        %v1156 = vsel %vm1153, %v969, 0.0
        %v1157 = vsel %vm1153, %v984, 0.0
        %v1158 = vsel %vm1153, %v999, 0.0
        %v1159 = vsel %vm1153, %v1014, 0.0
        %v1160 = vsel %vm1153, %v1029, 0.0
        %v1161 = vadd.f32 %v563, %v1154
        %v1162 = vadd.f32 %v566, %v1155
        %v1163 = vadd.f32 %v569, %v1156
        %v1164 = vadd.f32 %v572, %v1157
        %v1165 = vadd.f32 %v575, %v1158
        %v1166 = vadd.f32 %v578, %v1159
        %v1167 = vadd.f32 %v581, %v1160
        %v1168 = vadd.f32 %v1161, %v1131
        %v1169 = vadd.f32 %v1162, %v1134
        %v1170 = vadd.f32 %v1163, %v1137
        %v1171 = vadd.f32 %v1164, %v1140
        %v1172 = vadd.f32 %v1165, %v1143
        %v1173 = vadd.f32 %v1166, %v1146
        %v1174 = vadd.f32 %v1167, %v1149
        %1175 = vst [vmem:[%s238] sm:$0xff] %v1168
        %1176 = vst [vmem:[%s238 + $0x8] sm:$0xff] %v1169
        %1177 = vst [vmem:[%s238 + $0x10] sm:$0xff] %v1170
        %1178 = vst [vmem:[%s238 + $0x18] sm:$0xff] %v1171
        %1179 = vst [vmem:[%s238 + $0x20] sm:$0xff] %v1172
        %1180 = vst [vmem:[%s238 + $0x28] sm:$0xff] %v1173
        %1181 = vst [vmem:[%s238 + $0x30] sm:$0xff] %v1174
        %s1182 = smul.u32 7, %s16
        %p1183 = scmp.lt.s32.totalorder %s1182, 13
        %s1184 = scalar_select %p1183, %s1182, 13
        %s1185 = smul.addr %s1184, 8
        %s1186 = scalar_lea.vmem %s4, %s1185
        // Predicated region
        $region41: #{vae_forward.1} parent=35 // pred_check
          %p1187 = pneg %p128
        $region42: #{vae_forward.1} parent=35 // pred_check_branch
          %1189 = sbr.rel (%p1187) target = $region44
        $region43: #{vae_forward.1} parent=35 // pred_region
          %s1190 = smul.u32 7, %s16
        $region44: #{vae_forward.1} parent=35 // pred_fallthru
          _
      $region36: #{vae_forward.1} parent=5 // pred_fallthru
        _
      %p1191 = scmp.le.s32.totalorder 2, %s11
      // Predicated region
      $region45: #{vae_forward.1} parent=5 // pred_check
        %p1192 = pneg %p1191
      $region46: #{vae_forward.1} parent=5 // pred_check_branch
        %1194 = sbr.rel (%p1192) target = $region48
      $region47: #{vae_forward.1} parent=5 // pred_region
        %s1195 = ssub.s32 %s11, 2
        // Predicated region
        $region49: #{vae_forward.1} parent=47 // pred_check
          %p1196 = pneg %p134
        $region50: #{vae_forward.1} parent=47 // pred_check_branch
          %1198 = sbr.rel (%p1196) target = $region52
        $region51: #{vae_forward.1} parent=47 // pred_region
          %s1199 = smul.u32 7, %s17
          %p1200 = scmp.lt.s32.totalorder %s1199, 13
          %s1201 = scalar_select %p1200, %s1199, 13
          %s1202 = smul.addr %s1201, 8
          %s1203 = scalar_lea.vmem %s4, %s1202
        $region52: #{vae_forward.1} parent=47 // pred_fallthru
          _
      $region48: #{vae_forward.1} parent=5 // pred_fallthru
        _
    $region6: #{vae_forward.1} parent=1 // loop_footer
      %s15 = sadd.s32 1, %s11
    $region7: #{vae_forward.1} parent=1 // loop_footer_branch
      %10 = sbr.rel target = $region3
    $region8: #{vae_forward.1} parent=1 // loop_exit
      _
    %1204 = vsyncpa [#allocation4], 1
    %s1205 = scalar_lea.sflag [#allocation4], 1
    %1206 = vsyncpa %s1205, 1

</llo_original>
